<compile_context>
chip_gen: v5e
topology: v5e:2x2
jax: 0.10.0
libtpu: 0.0.40
codegen_flags: <defaults>
</compile_context>

<pallas_src>
import numpy as np
import jax
import jax.numpy as jnp
from jax.experimental import pallas as pl
from jax.experimental.pallas import tpu as pltpu

C = 4   # channels of every conv in the module
K = 2   # kernel size


def model_kernel(x_ref, w0_ref, b0_ref, w1m_ref, b1m_ref, w2_ref, b2_ref,
                 out_ref, z_ref):
    # x_ref: (N, C, H, W) in VMEM; weights/biases are flat f32 arrays in SMEM.
    N, _, H, W = x_ref.shape
    H1, W1 = H - 1, W - 1      # after self.conv   (H1 == C by construction)
    H2, W2 = H - 2, W - 2      # after self.conv1

    def w0(co, ci, di, dj):     # Conv2d weight layout (out, in, kH, kW), flat
        return w0_ref[((co * C + ci) * K + di) * K + dj]

    def w2(ci, co, di, dj):     # ConvTranspose2d weight layout (in, out, kH, kW)
        return w2_ref[((ci * C + co) * K + di) * K + dj]

    # ---- self.conv: Conv2d(4, 4, 2), valid padding --------------------------
    # Hoisted shifted input slices: 16 strided loads, each reused by all 4
    # output channels (instead of 64 re-emitted slices).
    xs = [[[x_ref[:, ci, di:di + H1, dj:dj + W1] for dj in range(K)]
           for di in range(K)] for ci in range(C)]
    y1 = []
    for co in range(C):
        acc = None
        for ci in range(C):
            for di in range(K):
                for dj in range(K):
                    term = w0(co, ci, di, dj) * xs[ci][di][dj]
                    acc = term if acc is None else acc + term
        y1.append(acc + b0_ref[co])                          # (N, H1, W1)

    # ---- z = mean(self.conv1(y1), dim=1, keepdim=True) ----------------------
    # The channel mean is linear, so it is folded into the weights in the
    # wrapper (w1m = mean_co(w1), b1m = mean_co(b1)): 16 FMAs instead of 64.
    zacc = None
    for ci in range(C):
        for di in range(K):
            for dj in range(K):
                term = w1m_ref[(ci * K + di) * K + dj] * \
                    y1[ci][:, di:di + H2, dj:dj + W2]
                zacc = term if zacc is None else zacc + term
    z_ref[...] = zacc + b1m_ref[0]                           # one full store

    # ---- x = torch.transpose(x, 1, 2) applied to y1 -------------------------
    # t[a][n, b, w] = y1[b][n, a, w]; 4 sublane concats of single-row slices.
    t = [jnp.concatenate([y1[b][:, a:a + 1, :] for b in range(C)], axis=1)
         for a in range(C)]                                  # each (N, C, W1)

    # ---- self.conv2: ConvTranspose2d(4, 4, 2), stride 1 ---------------------
    # TODO(synk): output_size=(z, x.shape[2]) in the PyTorch module is not a
    # valid size spec (z is a tensor); for stride=1 / output_padding=0 the
    # output spatial size is uniquely (Hin+1, Win+1), so the hint is ignored.
    # Output is emitted in the natural (N, C, H, W) layout; the final
    # transpose(1,2) is done in the wrapper.  The (di, dj) shifted additions
    # are 4 sliced read-modify-writes per output channel on the output ref
    # (replaces ~50 zero-concat relayouts of the previous _shift_pad).
    for co in range(C):
        out_ref[:, co, :, :] = jnp.full((N, H, W), b2_ref[co], jnp.float32)
        for di in range(K):
            for dj in range(K):
                s = None
                for a in range(C):
                    term = w2(a, co, di, dj) * t[a]
                    s = term if s is None else s + term
                out_ref[:, co, di:di + H1, dj:dj + W1] += s


def model_forward(x, params):
    w0, b0, w1, b1, w2, b2 = params
    N, Cx, H, W = x.shape
    assert Cx == C and H - 1 == C, "transpose(1,2)+ConvTranspose2d(4,..) needs H-1 == 4"
    H2, W2 = H - 2, W - 2

    # mean over conv1's output channels is linear -> fold it into the weights
    # (64 floats; negligible wrapper-side work).
    w1m = jnp.mean(w1, axis=0).reshape(-1)    # (C*K*K,) in (ci, di, dj) order
    b1m = jnp.mean(b1).reshape(1)             # (1,)

    smem = pltpu.MemorySpace.SMEM
    vmem = pltpu.MemorySpace.VMEM
    out_nchw, z3 = pl.pallas_call(
        model_kernel,
        out_shape=(
            jax.ShapeDtypeStruct((N, C, H, W), jnp.float32),  # conv-T output
            jax.ShapeDtypeStruct((N, H2, W2), jnp.float32),   # z (no channel dim)
        ),
        in_specs=[
            pl.BlockSpec(memory_space=vmem),   # x (whole array)
            pl.BlockSpec(memory_space=smem),   # w0 flat
            pl.BlockSpec(memory_space=smem),   # b0
            pl.BlockSpec(memory_space=smem),   # mean(w1) flat
            pl.BlockSpec(memory_space=smem),   # mean(b1)
            pl.BlockSpec(memory_space=smem),   # w2 flat
            pl.BlockSpec(memory_space=smem),   # b2
        ],
        out_specs=(
            pl.BlockSpec(memory_space=vmem),
            pl.BlockSpec(memory_space=vmem),
        ),
    )(x, w0.reshape(-1), b0, w1m, b1m, w2.reshape(-1), b2)

    out = jnp.transpose(out_nchw, (0, 2, 1, 3))   # final transpose(1,2) — free in XLA
    z = z3.reshape(N, 1, H2, W2)
    return out, z


def reference_forward(x, params):
    w0, b0, w1, b1, w2, b2 = (np.asarray(p, np.float32) for p in params)
    x = np.asarray(x, np.float32)

    def conv2d(inp, w, b):
        N, Cin, H, W = inp.shape
        Cout = w.shape[0]
        Ho, Wo = H - 1, W - 1
        out = np.zeros((N, Cout, Ho, Wo), np.float32) + b[None, :, None, None]
        for n in range(N):
            for co in range(Cout):
                for ci in range(Cin):
                    for di in range(K):
                        for dj in range(K):
                            out[n, co] += w[co, ci, di, dj] * inp[n, ci, di:di + Ho, dj:dj + Wo]
        return out

    def conv_transpose2d(inp, w, b):
        N, Cin, H, W = inp.shape
        Cout = w.shape[1]
        out = np.zeros((N, Cout, H + 1, W + 1), np.float32) + b[None, :, None, None]
        for n in range(N):
            for ci in range(Cin):
                for co in range(Cout):
                    for di in range(K):
                        for dj in range(K):
                            out[n, co, di:di + H, dj:dj + W] += w[ci, co, di, dj] * inp[n, ci]
        return out

    y1 = conv2d(x, w0, b0)
    z = conv2d(y1, w1, b1).mean(axis=1, keepdims=True)
    t = np.transpose(y1, (0, 2, 1, 3))
    y2 = conv_transpose2d(t, w2, b2)
    return np.transpose(y2, (0, 2, 1, 3)), z


if __name__ == "__main__":
    key = jax.random.PRNGKey(0)
    ks = jax.random.split(key, 9)

    def uinit(k, shape, fan_in):
        bound = 1.0 / np.sqrt(fan_in)
        return jax.random.uniform(k, shape, jnp.float32, -bound, bound)

    # Conv2d weight: (out, in, kH, kW); ConvTranspose2d weight: (in, out, kH, kW)
    w0 = uinit(ks[0], (C, C, K, K), C * K * K); b0 = uinit(ks[1], (C,), C * K * K)
    w1 = uinit(ks[2], (C, C, K, K), C * K * K); b1 = uinit(ks[3], (C,), C * K * K)
    w2 = uinit(ks[4], (C, C, K, K), C * K * K); b2 = uinit(ks[5], (C,), C * K * K)
    # self.fc = Linear(4, 1) is defined in __init__ but never used in forward()
    _fc_w = uinit(ks[6], (1, C), C); _fc_b = uinit(ks[7], (1,), C)

    x = jax.random.normal(ks[8], (2, C, 5, 16), jnp.float32)

    params = (w0, b0, w1, b1, w2, b2)
    out, z = jax.jit(model_forward)(x, params)
    out = jax.block_until_ready(out)
    z = jax.block_until_ready(z)

    ref_out, ref_z = reference_forward(x, params)
    np.testing.assert_allclose(np.asarray(out), ref_out, rtol=1e-4, atol=1e-4)
    np.testing.assert_allclose(np.asarray(z), ref_z, rtol=1e-4, atol=1e-4)
    print("KERNEL_OK")
</pallas_src>

<mosaic_0001>
module attributes {stable_mosaic.version = 11 : i64} {
  func.func @model_kernel(%arg0: memref<2x4x5x16xf32, #tpu.memory_space<vmem>>, %arg1: memref<64xf32, #tpu.memory_space<smem>>, %arg2: memref<4xf32, #tpu.memory_space<smem>>, %arg3: memref<16xf32, #tpu.memory_space<smem>>, %arg4: memref<1xf32, #tpu.memory_space<smem>>, %arg5: memref<64xf32, #tpu.memory_space<smem>>, %arg6: memref<4xf32, #tpu.memory_space<smem>>, %arg7: memref<2x4x5x16xf32, #tpu.memory_space<vmem>>, %arg8: memref<2x3x14xf32, #tpu.memory_space<vmem>>) attributes {dimension_semantics = [], scalar_prefetch = 0 : i64, scratch_operands = 0 : i64, tpu.core_type = #tpu.core_type<tc>} {
    %c0 = arith.constant 0 : index
    %c0_0 = arith.constant 0 : index
    %c0_1 = arith.constant 0 : index
    %c0_2 = arith.constant 0 : index
    %0 = vector.load %arg0[%c0, %c0_0, %c0_1, %c0_2] : memref<2x4x5x16xf32, #tpu.memory_space<vmem>>, vector<2x1x4x15xf32>
    %1 = vector.shape_cast %0 : vector<2x1x4x15xf32> to vector<2x4x15xf32>
    %c0_3 = arith.constant 0 : index
    %c0_4 = arith.constant 0 : index
    %c0_5 = arith.constant 0 : index
    %c1 = arith.constant 1 : index
    %2 = vector.load %arg0[%c0_3, %c0_4, %c0_5, %c1] : memref<2x4x5x16xf32, #tpu.memory_space<vmem>>, vector<2x1x4x15xf32>
    %3 = vector.shape_cast %2 : vector<2x1x4x15xf32> to vector<2x4x15xf32>
    %c0_6 = arith.constant 0 : index
    %c0_7 = arith.constant 0 : index
    %c1_8 = arith.constant 1 : index
    %c0_9 = arith.constant 0 : index
    %4 = vector.load %arg0[%c0_6, %c0_7, %c1_8, %c0_9] : memref<2x4x5x16xf32, #tpu.memory_space<vmem>>, vector<2x1x4x15xf32>
    %5 = vector.shape_cast %4 : vector<2x1x4x15xf32> to vector<2x4x15xf32>
    %c0_10 = arith.constant 0 : index
    %c0_11 = arith.constant 0 : index
    %c1_12 = arith.constant 1 : index
    %c1_13 = arith.constant 1 : index
    %6 = vector.load %arg0[%c0_10, %c0_11, %c1_12, %c1_13] : memref<2x4x5x16xf32, #tpu.memory_space<vmem>>, vector<2x1x4x15xf32>
    %7 = vector.shape_cast %6 : vector<2x1x4x15xf32> to vector<2x4x15xf32>
    %c0_14 = arith.constant 0 : index
    %c1_15 = arith.constant 1 : index
    %c0_16 = arith.constant 0 : index
    %c0_17 = arith.constant 0 : index
    %8 = vector.load %arg0[%c0_14, %c1_15, %c0_16, %c0_17] : memref<2x4x5x16xf32, #tpu.memory_space<vmem>>, vector<2x1x4x15xf32>
    %9 = vector.shape_cast %8 : vector<2x1x4x15xf32> to vector<2x4x15xf32>
    %c0_18 = arith.constant 0 : index
    %c1_19 = arith.constant 1 : index
    %c0_20 = arith.constant 0 : index
    %c1_21 = arith.constant 1 : index
    %10 = vector.load %arg0[%c0_18, %c1_19, %c0_20, %c1_21] : memref<2x4x5x16xf32, #tpu.memory_space<vmem>>, vector<2x1x4x15xf32>
    %11 = vector.shape_cast %10 : vector<2x1x4x15xf32> to vector<2x4x15xf32>
    %c0_22 = arith.constant 0 : index
    %c1_23 = arith.constant 1 : index
    %c1_24 = arith.constant 1 : index
    %c0_25 = arith.constant 0 : index
    %12 = vector.load %arg0[%c0_22, %c1_23, %c1_24, %c0_25] : memref<2x4x5x16xf32, #tpu.memory_space<vmem>>, vector<2x1x4x15xf32>
    %13 = vector.shape_cast %12 : vector<2x1x4x15xf32> to vector<2x4x15xf32>
    %c0_26 = arith.constant 0 : index
    %c1_27 = arith.constant 1 : index
    %c1_28 = arith.constant 1 : index
    %c1_29 = arith.constant 1 : index
    %14 = vector.load %arg0[%c0_26, %c1_27, %c1_28, %c1_29] : memref<2x4x5x16xf32, #tpu.memory_space<vmem>>, vector<2x1x4x15xf32>
    %15 = vector.shape_cast %14 : vector<2x1x4x15xf32> to vector<2x4x15xf32>
    %c0_30 = arith.constant 0 : index
    %c2 = arith.constant 2 : index
    %c0_31 = arith.constant 0 : index
    %c0_32 = arith.constant 0 : index
    %16 = vector.load %arg0[%c0_30, %c2, %c0_31, %c0_32] : memref<2x4x5x16xf32, #tpu.memory_space<vmem>>, vector<2x1x4x15xf32>
    %17 = vector.shape_cast %16 : vector<2x1x4x15xf32> to vector<2x4x15xf32>
    %c0_33 = arith.constant 0 : index
    %c2_34 = arith.constant 2 : index
    %c0_35 = arith.constant 0 : index
    %c1_36 = arith.constant 1 : index
    %18 = vector.load %arg0[%c0_33, %c2_34, %c0_35, %c1_36] : memref<2x4x5x16xf32, #tpu.memory_space<vmem>>, vector<2x1x4x15xf32>
    %19 = vector.shape_cast %18 : vector<2x1x4x15xf32> to vector<2x4x15xf32>
    %c0_37 = arith.constant 0 : index
    %c2_38 = arith.constant 2 : index
    %c1_39 = arith.constant 1 : index
    %c0_40 = arith.constant 0 : index
    %20 = vector.load %arg0[%c0_37, %c2_38, %c1_39, %c0_40] : memref<2x4x5x16xf32, #tpu.memory_space<vmem>>, vector<2x1x4x15xf32>
    %21 = vector.shape_cast %20 : vector<2x1x4x15xf32> to vector<2x4x15xf32>
    %c0_41 = arith.constant 0 : index
    %c2_42 = arith.constant 2 : index
    %c1_43 = arith.constant 1 : index
    %c1_44 = arith.constant 1 : index
    %22 = vector.load %arg0[%c0_41, %c2_42, %c1_43, %c1_44] : memref<2x4x5x16xf32, #tpu.memory_space<vmem>>, vector<2x1x4x15xf32>
    %23 = vector.shape_cast %22 : vector<2x1x4x15xf32> to vector<2x4x15xf32>
    %c0_45 = arith.constant 0 : index
    %c3 = arith.constant 3 : index
    %c0_46 = arith.constant 0 : index
    %c0_47 = arith.constant 0 : index
    %24 = vector.load %arg0[%c0_45, %c3, %c0_46, %c0_47] : memref<2x4x5x16xf32, #tpu.memory_space<vmem>>, vector<2x1x4x15xf32>
    %25 = vector.shape_cast %24 : vector<2x1x4x15xf32> to vector<2x4x15xf32>
    %c0_48 = arith.constant 0 : index
    %c3_49 = arith.constant 3 : index
    %c0_50 = arith.constant 0 : index
    %c1_51 = arith.constant 1 : index
    %26 = vector.load %arg0[%c0_48, %c3_49, %c0_50, %c1_51] : memref<2x4x5x16xf32, #tpu.memory_space<vmem>>, vector<2x1x4x15xf32>
    %27 = vector.shape_cast %26 : vector<2x1x4x15xf32> to vector<2x4x15xf32>
    %c0_52 = arith.constant 0 : index
    %c3_53 = arith.constant 3 : index
    %c1_54 = arith.constant 1 : index
    %c0_55 = arith.constant 0 : index
    %28 = vector.load %arg0[%c0_52, %c3_53, %c1_54, %c0_55] : memref<2x4x5x16xf32, #tpu.memory_space<vmem>>, vector<2x1x4x15xf32>
    %29 = vector.shape_cast %28 : vector<2x1x4x15xf32> to vector<2x4x15xf32>
    %c0_56 = arith.constant 0 : index
    %c3_57 = arith.constant 3 : index
    %c1_58 = arith.constant 1 : index
    %c1_59 = arith.constant 1 : index
    %30 = vector.load %arg0[%c0_56, %c3_57, %c1_58, %c1_59] : memref<2x4x5x16xf32, #tpu.memory_space<vmem>>, vector<2x1x4x15xf32>
    %31 = vector.shape_cast %30 : vector<2x1x4x15xf32> to vector<2x4x15xf32>
    %c0_60 = arith.constant 0 : index
    %32 = memref.load %arg1[%c0_60] : memref<64xf32, #tpu.memory_space<smem>>
    %33 = vector.broadcast %32 : f32 to vector<2x4x15xf32>
    %34 = arith.mulf %33, %1 : vector<2x4x15xf32>
    %c1_61 = arith.constant 1 : index
    %35 = memref.load %arg1[%c1_61] : memref<64xf32, #tpu.memory_space<smem>>
    %36 = vector.broadcast %35 : f32 to vector<2x4x15xf32>
    %37 = arith.mulf %36, %3 : vector<2x4x15xf32>
    %38 = arith.addf %34, %37 : vector<2x4x15xf32>
    %c2_62 = arith.constant 2 : index
    %39 = memref.load %arg1[%c2_62] : memref<64xf32, #tpu.memory_space<smem>>
    %40 = vector.broadcast %39 : f32 to vector<2x4x15xf32>
    %41 = arith.mulf %40, %5 : vector<2x4x15xf32>
    %42 = arith.addf %38, %41 : vector<2x4x15xf32>
    %c3_63 = arith.constant 3 : index
    %43 = memref.load %arg1[%c3_63] : memref<64xf32, #tpu.memory_space<smem>>
    %44 = vector.broadcast %43 : f32 to vector<2x4x15xf32>
    %45 = arith.mulf %44, %7 : vector<2x4x15xf32>
    %46 = arith.addf %42, %45 : vector<2x4x15xf32>
    %c4 = arith.constant 4 : index
    %47 = memref.load %arg1[%c4] : memref<64xf32, #tpu.memory_space<smem>>
    %48 = vector.broadcast %47 : f32 to vector<2x4x15xf32>
    %49 = arith.mulf %48, %9 : vector<2x4x15xf32>
    %50 = arith.addf %46, %49 : vector<2x4x15xf32>
    %c5 = arith.constant 5 : index
    %51 = memref.load %arg1[%c5] : memref<64xf32, #tpu.memory_space<smem>>
    %52 = vector.broadcast %51 : f32 to vector<2x4x15xf32>
    %53 = arith.mulf %52, %11 : vector<2x4x15xf32>
    %54 = arith.addf %50, %53 : vector<2x4x15xf32>
    %c6 = arith.constant 6 : index
    %55 = memref.load %arg1[%c6] : memref<64xf32, #tpu.memory_space<smem>>
    %56 = vector.broadcast %55 : f32 to vector<2x4x15xf32>
    %57 = arith.mulf %56, %13 : vector<2x4x15xf32>
    %58 = arith.addf %54, %57 : vector<2x4x15xf32>
    %c7 = arith.constant 7 : index
    %59 = memref.load %arg1[%c7] : memref<64xf32, #tpu.memory_space<smem>>
    %60 = vector.broadcast %59 : f32 to vector<2x4x15xf32>
    %61 = arith.mulf %60, %15 : vector<2x4x15xf32>
    %62 = arith.addf %58, %61 : vector<2x4x15xf32>
    %c8 = arith.constant 8 : index
    %63 = memref.load %arg1[%c8] : memref<64xf32, #tpu.memory_space<smem>>
    %64 = vector.broadcast %63 : f32 to vector<2x4x15xf32>
    %65 = arith.mulf %64, %17 : vector<2x4x15xf32>
    %66 = arith.addf %62, %65 : vector<2x4x15xf32>
    %c9 = arith.constant 9 : index
    %67 = memref.load %arg1[%c9] : memref<64xf32, #tpu.memory_space<smem>>
    %68 = vector.broadcast %67 : f32 to vector<2x4x15xf32>
    %69 = arith.mulf %68, %19 : vector<2x4x15xf32>
    %70 = arith.addf %66, %69 : vector<2x4x15xf32>
    %c10 = arith.constant 10 : index
    %71 = memref.load %arg1[%c10] : memref<64xf32, #tpu.memory_space<smem>>
    %72 = vector.broadcast %71 : f32 to vector<2x4x15xf32>
    %73 = arith.mulf %72, %21 : vector<2x4x15xf32>
    %74 = arith.addf %70, %73 : vector<2x4x15xf32>
    %c11 = arith.constant 11 : index
    %75 = memref.load %arg1[%c11] : memref<64xf32, #tpu.memory_space<smem>>
    %76 = vector.broadcast %75 : f32 to vector<2x4x15xf32>
    %77 = arith.mulf %76, %23 : vector<2x4x15xf32>
    %78 = arith.addf %74, %77 : vector<2x4x15xf32>
    %c12 = arith.constant 12 : index
    %79 = memref.load %arg1[%c12] : memref<64xf32, #tpu.memory_space<smem>>
    %80 = vector.broadcast %79 : f32 to vector<2x4x15xf32>
    %81 = arith.mulf %80, %25 : vector<2x4x15xf32>
    %82 = arith.addf %78, %81 : vector<2x4x15xf32>
    %c13 = arith.constant 13 : index
    %83 = memref.load %arg1[%c13] : memref<64xf32, #tpu.memory_space<smem>>
    %84 = vector.broadcast %83 : f32 to vector<2x4x15xf32>
    %85 = arith.mulf %84, %27 : vector<2x4x15xf32>
    %86 = arith.addf %82, %85 : vector<2x4x15xf32>
    %c14 = arith.constant 14 : index
    %87 = memref.load %arg1[%c14] : memref<64xf32, #tpu.memory_space<smem>>
    %88 = vector.broadcast %87 : f32 to vector<2x4x15xf32>
    %89 = arith.mulf %88, %29 : vector<2x4x15xf32>
    %90 = arith.addf %86, %89 : vector<2x4x15xf32>
    %c15 = arith.constant 15 : index
    %91 = memref.load %arg1[%c15] : memref<64xf32, #tpu.memory_space<smem>>
    %92 = vector.broadcast %91 : f32 to vector<2x4x15xf32>
    %93 = arith.mulf %92, %31 : vector<2x4x15xf32>
    %94 = arith.addf %90, %93 : vector<2x4x15xf32>
    %c0_64 = arith.constant 0 : index
    %95 = memref.load %arg2[%c0_64] : memref<4xf32, #tpu.memory_space<smem>>
    %96 = vector.broadcast %95 : f32 to vector<2x4x15xf32>
    %97 = arith.addf %94, %96 : vector<2x4x15xf32>
    %c16 = arith.constant 16 : index
    %98 = memref.load %arg1[%c16] : memref<64xf32, #tpu.memory_space<smem>>
    %99 = vector.broadcast %98 : f32 to vector<2x4x15xf32>
    %100 = arith.mulf %99, %1 : vector<2x4x15xf32>
    %c17 = arith.constant 17 : index
    %101 = memref.load %arg1[%c17] : memref<64xf32, #tpu.memory_space<smem>>
    %102 = vector.broadcast %101 : f32 to vector<2x4x15xf32>
    %103 = arith.mulf %102, %3 : vector<2x4x15xf32>
    %104 = arith.addf %100, %103 : vector<2x4x15xf32>
    %c18 = arith.constant 18 : index
    %105 = memref.load %arg1[%c18] : memref<64xf32, #tpu.memory_space<smem>>
    %106 = vector.broadcast %105 : f32 to vector<2x4x15xf32>
    %107 = arith.mulf %106, %5 : vector<2x4x15xf32>
    %108 = arith.addf %104, %107 : vector<2x4x15xf32>
    %c19 = arith.constant 19 : index
    %109 = memref.load %arg1[%c19] : memref<64xf32, #tpu.memory_space<smem>>
    %110 = vector.broadcast %109 : f32 to vector<2x4x15xf32>
    %111 = arith.mulf %110, %7 : vector<2x4x15xf32>
    %112 = arith.addf %108, %111 : vector<2x4x15xf32>
    %c20 = arith.constant 20 : index
    %113 = memref.load %arg1[%c20] : memref<64xf32, #tpu.memory_space<smem>>
    %114 = vector.broadcast %113 : f32 to vector<2x4x15xf32>
    %115 = arith.mulf %114, %9 : vector<2x4x15xf32>
    %116 = arith.addf %112, %115 : vector<2x4x15xf32>
    %c21 = arith.constant 21 : index
    %117 = memref.load %arg1[%c21] : memref<64xf32, #tpu.memory_space<smem>>
    %118 = vector.broadcast %117 : f32 to vector<2x4x15xf32>
    %119 = arith.mulf %118, %11 : vector<2x4x15xf32>
    %120 = arith.addf %116, %119 : vector<2x4x15xf32>
    %c22 = arith.constant 22 : index
    %121 = memref.load %arg1[%c22] : memref<64xf32, #tpu.memory_space<smem>>
    %122 = vector.broadcast %121 : f32 to vector<2x4x15xf32>
    %123 = arith.mulf %122, %13 : vector<2x4x15xf32>
    %124 = arith.addf %120, %123 : vector<2x4x15xf32>
    %c23 = arith.constant 23 : index
    %125 = memref.load %arg1[%c23] : memref<64xf32, #tpu.memory_space<smem>>
    %126 = vector.broadcast %125 : f32 to vector<2x4x15xf32>
    %127 = arith.mulf %126, %15 : vector<2x4x15xf32>
    %128 = arith.addf %124, %127 : vector<2x4x15xf32>
    %c24 = arith.constant 24 : index
    %129 = memref.load %arg1[%c24] : memref<64xf32, #tpu.memory_space<smem>>
    %130 = vector.broadcast %129 : f32 to vector<2x4x15xf32>
    %131 = arith.mulf %130, %17 : vector<2x4x15xf32>
    %132 = arith.addf %128, %131 : vector<2x4x15xf32>
    %c25 = arith.constant 25 : index
    %133 = memref.load %arg1[%c25] : memref<64xf32, #tpu.memory_space<smem>>
    %134 = vector.broadcast %133 : f32 to vector<2x4x15xf32>
    %135 = arith.mulf %134, %19 : vector<2x4x15xf32>
    %136 = arith.addf %132, %135 : vector<2x4x15xf32>
    %c26 = arith.constant 26 : index
    %137 = memref.load %arg1[%c26] : memref<64xf32, #tpu.memory_space<smem>>
    %138 = vector.broadcast %137 : f32 to vector<2x4x15xf32>
    %139 = arith.mulf %138, %21 : vector<2x4x15xf32>
    %140 = arith.addf %136, %139 : vector<2x4x15xf32>
    %c27 = arith.constant 27 : index
    %141 = memref.load %arg1[%c27] : memref<64xf32, #tpu.memory_space<smem>>
    %142 = vector.broadcast %141 : f32 to vector<2x4x15xf32>
    %143 = arith.mulf %142, %23 : vector<2x4x15xf32>
    %144 = arith.addf %140, %143 : vector<2x4x15xf32>
    %c28 = arith.constant 28 : index
    %145 = memref.load %arg1[%c28] : memref<64xf32, #tpu.memory_space<smem>>
    %146 = vector.broadcast %145 : f32 to vector<2x4x15xf32>
    %147 = arith.mulf %146, %25 : vector<2x4x15xf32>
    %148 = arith.addf %144, %147 : vector<2x4x15xf32>
    %c29 = arith.constant 29 : index
    %149 = memref.load %arg1[%c29] : memref<64xf32, #tpu.memory_space<smem>>
    %150 = vector.broadcast %149 : f32 to vector<2x4x15xf32>
    %151 = arith.mulf %150, %27 : vector<2x4x15xf32>
    %152 = arith.addf %148, %151 : vector<2x4x15xf32>
    %c30 = arith.constant 30 : index
    %153 = memref.load %arg1[%c30] : memref<64xf32, #tpu.memory_space<smem>>
    %154 = vector.broadcast %153 : f32 to vector<2x4x15xf32>
    %155 = arith.mulf %154, %29 : vector<2x4x15xf32>
    %156 = arith.addf %152, %155 : vector<2x4x15xf32>
    %c31 = arith.constant 31 : index
    %157 = memref.load %arg1[%c31] : memref<64xf32, #tpu.memory_space<smem>>
    %158 = vector.broadcast %157 : f32 to vector<2x4x15xf32>
    %159 = arith.mulf %158, %31 : vector<2x4x15xf32>
    %160 = arith.addf %156, %159 : vector<2x4x15xf32>
    %c1_65 = arith.constant 1 : index
    %161 = memref.load %arg2[%c1_65] : memref<4xf32, #tpu.memory_space<smem>>
    %162 = vector.broadcast %161 : f32 to vector<2x4x15xf32>
    %163 = arith.addf %160, %162 : vector<2x4x15xf32>
    %c32 = arith.constant 32 : index
    %164 = memref.load %arg1[%c32] : memref<64xf32, #tpu.memory_space<smem>>
    %165 = vector.broadcast %164 : f32 to vector<2x4x15xf32>
    %166 = arith.mulf %165, %1 : vector<2x4x15xf32>
    %c33 = arith.constant 33 : index
    %167 = memref.load %arg1[%c33] : memref<64xf32, #tpu.memory_space<smem>>
    %168 = vector.broadcast %167 : f32 to vector<2x4x15xf32>
    %169 = arith.mulf %168, %3 : vector<2x4x15xf32>
    %170 = arith.addf %166, %169 : vector<2x4x15xf32>
    %c34 = arith.constant 34 : index
    %171 = memref.load %arg1[%c34] : memref<64xf32, #tpu.memory_space<smem>>
    %172 = vector.broadcast %171 : f32 to vector<2x4x15xf32>
    %173 = arith.mulf %172, %5 : vector<2x4x15xf32>
    %174 = arith.addf %170, %173 : vector<2x4x15xf32>
    %c35 = arith.constant 35 : index
    %175 = memref.load %arg1[%c35] : memref<64xf32, #tpu.memory_space<smem>>
    %176 = vector.broadcast %175 : f32 to vector<2x4x15xf32>
    %177 = arith.mulf %176, %7 : vector<2x4x15xf32>
    %178 = arith.addf %174, %177 : vector<2x4x15xf32>
    %c36 = arith.constant 36 : index
    %179 = memref.load %arg1[%c36] : memref<64xf32, #tpu.memory_space<smem>>
    %180 = vector.broadcast %179 : f32 to vector<2x4x15xf32>
    %181 = arith.mulf %180, %9 : vector<2x4x15xf32>
    %182 = arith.addf %178, %181 : vector<2x4x15xf32>
    %c37 = arith.constant 37 : index
    %183 = memref.load %arg1[%c37] : memref<64xf32, #tpu.memory_space<smem>>
    %184 = vector.broadcast %183 : f32 to vector<2x4x15xf32>
    %185 = arith.mulf %184, %11 : vector<2x4x15xf32>
    %186 = arith.addf %182, %185 : vector<2x4x15xf32>
    %c38 = arith.constant 38 : index
    %187 = memref.load %arg1[%c38] : memref<64xf32, #tpu.memory_space<smem>>
    %188 = vector.broadcast %187 : f32 to vector<2x4x15xf32>
    %189 = arith.mulf %188, %13 : vector<2x4x15xf32>
    %190 = arith.addf %186, %189 : vector<2x4x15xf32>
    %c39 = arith.constant 39 : index
    %191 = memref.load %arg1[%c39] : memref<64xf32, #tpu.memory_space<smem>>
    %192 = vector.broadcast %191 : f32 to vector<2x4x15xf32>
    %193 = arith.mulf %192, %15 : vector<2x4x15xf32>
    %194 = arith.addf %190, %193 : vector<2x4x15xf32>
    %c40 = arith.constant 40 : index
    %195 = memref.load %arg1[%c40] : memref<64xf32, #tpu.memory_space<smem>>
    %196 = vector.broadcast %195 : f32 to vector<2x4x15xf32>
    %197 = arith.mulf %196, %17 : vector<2x4x15xf32>
    %198 = arith.addf %194, %197 : vector<2x4x15xf32>
    %c41 = arith.constant 41 : index
    %199 = memref.load %arg1[%c41] : memref<64xf32, #tpu.memory_space<smem>>
    %200 = vector.broadcast %199 : f32 to vector<2x4x15xf32>
    %201 = arith.mulf %200, %19 : vector<2x4x15xf32>
    %202 = arith.addf %198, %201 : vector<2x4x15xf32>
    %c42 = arith.constant 42 : index
    %203 = memref.load %arg1[%c42] : memref<64xf32, #tpu.memory_space<smem>>
    %204 = vector.broadcast %203 : f32 to vector<2x4x15xf32>
    %205 = arith.mulf %204, %21 : vector<2x4x15xf32>
    %206 = arith.addf %202, %205 : vector<2x4x15xf32>
    %c43 = arith.constant 43 : index
    %207 = memref.load %arg1[%c43] : memref<64xf32, #tpu.memory_space<smem>>
    %208 = vector.broadcast %207 : f32 to vector<2x4x15xf32>
    %209 = arith.mulf %208, %23 : vector<2x4x15xf32>
    %210 = arith.addf %206, %209 : vector<2x4x15xf32>
    %c44 = arith.constant 44 : index
    %211 = memref.load %arg1[%c44] : memref<64xf32, #tpu.memory_space<smem>>
    %212 = vector.broadcast %211 : f32 to vector<2x4x15xf32>
    %213 = arith.mulf %212, %25 : vector<2x4x15xf32>
    %214 = arith.addf %210, %213 : vector<2x4x15xf32>
    %c45 = arith.constant 45 : index
    %215 = memref.load %arg1[%c45] : memref<64xf32, #tpu.memory_space<smem>>
    %216 = vector.broadcast %215 : f32 to vector<2x4x15xf32>
    %217 = arith.mulf %216, %27 : vector<2x4x15xf32>
    %218 = arith.addf %214, %217 : vector<2x4x15xf32>
    %c46 = arith.constant 46 : index
    %219 = memref.load %arg1[%c46] : memref<64xf32, #tpu.memory_space<smem>>
    %220 = vector.broadcast %219 : f32 to vector<2x4x15xf32>
    %221 = arith.mulf %220, %29 : vector<2x4x15xf32>
    %222 = arith.addf %218, %221 : vector<2x4x15xf32>
    %c47 = arith.constant 47 : index
    %223 = memref.load %arg1[%c47] : memref<64xf32, #tpu.memory_space<smem>>
    %224 = vector.broadcast %223 : f32 to vector<2x4x15xf32>
    %225 = arith.mulf %224, %31 : vector<2x4x15xf32>
    %226 = arith.addf %222, %225 : vector<2x4x15xf32>
    %c2_66 = arith.constant 2 : index
    %227 = memref.load %arg2[%c2_66] : memref<4xf32, #tpu.memory_space<smem>>
    %228 = vector.broadcast %227 : f32 to vector<2x4x15xf32>
    %229 = arith.addf %226, %228 : vector<2x4x15xf32>
    %c48 = arith.constant 48 : index
    %230 = memref.load %arg1[%c48] : memref<64xf32, #tpu.memory_space<smem>>
    %231 = vector.broadcast %230 : f32 to vector<2x4x15xf32>
    %232 = arith.mulf %231, %1 : vector<2x4x15xf32>
    %c49 = arith.constant 49 : index
    %233 = memref.load %arg1[%c49] : memref<64xf32, #tpu.memory_space<smem>>
    %234 = vector.broadcast %233 : f32 to vector<2x4x15xf32>
    %235 = arith.mulf %234, %3 : vector<2x4x15xf32>
    %236 = arith.addf %232, %235 : vector<2x4x15xf32>
    %c50 = arith.constant 50 : index
    %237 = memref.load %arg1[%c50] : memref<64xf32, #tpu.memory_space<smem>>
    %238 = vector.broadcast %237 : f32 to vector<2x4x15xf32>
    %239 = arith.mulf %238, %5 : vector<2x4x15xf32>
    %240 = arith.addf %236, %239 : vector<2x4x15xf32>
    %c51 = arith.constant 51 : index
    %241 = memref.load %arg1[%c51] : memref<64xf32, #tpu.memory_space<smem>>
    %242 = vector.broadcast %241 : f32 to vector<2x4x15xf32>
    %243 = arith.mulf %242, %7 : vector<2x4x15xf32>
    %244 = arith.addf %240, %243 : vector<2x4x15xf32>
    %c52 = arith.constant 52 : index
    %245 = memref.load %arg1[%c52] : memref<64xf32, #tpu.memory_space<smem>>
    %246 = vector.broadcast %245 : f32 to vector<2x4x15xf32>
    %247 = arith.mulf %246, %9 : vector<2x4x15xf32>
    %248 = arith.addf %244, %247 : vector<2x4x15xf32>
    %c53 = arith.constant 53 : index
    %249 = memref.load %arg1[%c53] : memref<64xf32, #tpu.memory_space<smem>>
    %250 = vector.broadcast %249 : f32 to vector<2x4x15xf32>
    %251 = arith.mulf %250, %11 : vector<2x4x15xf32>
    %252 = arith.addf %248, %251 : vector<2x4x15xf32>
    %c54 = arith.constant 54 : index
    %253 = memref.load %arg1[%c54] : memref<64xf32, #tpu.memory_space<smem>>
    %254 = vector.broadcast %253 : f32 to vector<2x4x15xf32>
    %255 = arith.mulf %254, %13 : vector<2x4x15xf32>
    %256 = arith.addf %252, %255 : vector<2x4x15xf32>
    %c55 = arith.constant 55 : index
    %257 = memref.load %arg1[%c55] : memref<64xf32, #tpu.memory_space<smem>>
    %258 = vector.broadcast %257 : f32 to vector<2x4x15xf32>
    %259 = arith.mulf %258, %15 : vector<2x4x15xf32>
    %260 = arith.addf %256, %259 : vector<2x4x15xf32>
    %c56 = arith.constant 56 : index
    %261 = memref.load %arg1[%c56] : memref<64xf32, #tpu.memory_space<smem>>
    %262 = vector.broadcast %261 : f32 to vector<2x4x15xf32>
    %263 = arith.mulf %262, %17 : vector<2x4x15xf32>
    %264 = arith.addf %260, %263 : vector<2x4x15xf32>
    %c57 = arith.constant 57 : index
    %265 = memref.load %arg1[%c57] : memref<64xf32, #tpu.memory_space<smem>>
    %266 = vector.broadcast %265 : f32 to vector<2x4x15xf32>
    %267 = arith.mulf %266, %19 : vector<2x4x15xf32>
    %268 = arith.addf %264, %267 : vector<2x4x15xf32>
    %c58 = arith.constant 58 : index
    %269 = memref.load %arg1[%c58] : memref<64xf32, #tpu.memory_space<smem>>
    %270 = vector.broadcast %269 : f32 to vector<2x4x15xf32>
    %271 = arith.mulf %270, %21 : vector<2x4x15xf32>
    %272 = arith.addf %268, %271 : vector<2x4x15xf32>
    %c59 = arith.constant 59 : index
    %273 = memref.load %arg1[%c59] : memref<64xf32, #tpu.memory_space<smem>>
    %274 = vector.broadcast %273 : f32 to vector<2x4x15xf32>
    %275 = arith.mulf %274, %23 : vector<2x4x15xf32>
    %276 = arith.addf %272, %275 : vector<2x4x15xf32>
    %c60 = arith.constant 60 : index
    %277 = memref.load %arg1[%c60] : memref<64xf32, #tpu.memory_space<smem>>
    %278 = vector.broadcast %277 : f32 to vector<2x4x15xf32>
    %279 = arith.mulf %278, %25 : vector<2x4x15xf32>
    %280 = arith.addf %276, %279 : vector<2x4x15xf32>
    %c61 = arith.constant 61 : index
    %281 = memref.load %arg1[%c61] : memref<64xf32, #tpu.memory_space<smem>>
    %282 = vector.broadcast %281 : f32 to vector<2x4x15xf32>
    %283 = arith.mulf %282, %27 : vector<2x4x15xf32>
    %284 = arith.addf %280, %283 : vector<2x4x15xf32>
    %c62 = arith.constant 62 : index
    %285 = memref.load %arg1[%c62] : memref<64xf32, #tpu.memory_space<smem>>
    %286 = vector.broadcast %285 : f32 to vector<2x4x15xf32>
    %287 = arith.mulf %286, %29 : vector<2x4x15xf32>
    %288 = arith.addf %284, %287 : vector<2x4x15xf32>
    %c63 = arith.constant 63 : index
    %289 = memref.load %arg1[%c63] : memref<64xf32, #tpu.memory_space<smem>>
    %290 = vector.broadcast %289 : f32 to vector<2x4x15xf32>
    %291 = arith.mulf %290, %31 : vector<2x4x15xf32>
    %292 = arith.addf %288, %291 : vector<2x4x15xf32>
    %c3_67 = arith.constant 3 : index
    %293 = memref.load %arg2[%c3_67] : memref<4xf32, #tpu.memory_space<smem>>
    %294 = vector.broadcast %293 : f32 to vector<2x4x15xf32>
    %295 = arith.addf %292, %294 : vector<2x4x15xf32>
    %c0_68 = arith.constant 0 : index
    %296 = memref.load %arg3[%c0_68] : memref<16xf32, #tpu.memory_space<smem>>
    %297 = vector.extract_strided_slice %97 {offsets = [0, 0, 0], sizes = [2, 3, 14], strides = [1, 1, 1]} : vector<2x4x15xf32> to vector<2x3x14xf32>
    %298 = vector.broadcast %296 : f32 to vector<2x3x14xf32>
    %299 = arith.mulf %298, %297 : vector<2x3x14xf32>
    %c1_69 = arith.constant 1 : index
    %300 = memref.load %arg3[%c1_69] : memref<16xf32, #tpu.memory_space<smem>>
    %301 = vector.extract_strided_slice %97 {offsets = [0, 0, 1], sizes = [2, 3, 14], strides = [1, 1, 1]} : vector<2x4x15xf32> to vector<2x3x14xf32>
    %302 = vector.broadcast %300 : f32 to vector<2x3x14xf32>
    %303 = arith.mulf %302, %301 : vector<2x3x14xf32>
    %304 = arith.addf %299, %303 : vector<2x3x14xf32>
    %c2_70 = arith.constant 2 : index
    %305 = memref.load %arg3[%c2_70] : memref<16xf32, #tpu.memory_space<smem>>
    %306 = vector.extract_strided_slice %97 {offsets = [0, 1, 0], sizes = [2, 3, 14], strides = [1, 1, 1]} : vector<2x4x15xf32> to vector<2x3x14xf32>
    %307 = vector.broadcast %305 : f32 to vector<2x3x14xf32>
    %308 = arith.mulf %307, %306 : vector<2x3x14xf32>
    %309 = arith.addf %304, %308 : vector<2x3x14xf32>
    %c3_71 = arith.constant 3 : index
    %310 = memref.load %arg3[%c3_71] : memref<16xf32, #tpu.memory_space<smem>>
    %311 = vector.extract_strided_slice %97 {offsets = [0, 1, 1], sizes = [2, 3, 14], strides = [1, 1, 1]} : vector<2x4x15xf32> to vector<2x3x14xf32>
    %312 = vector.broadcast %310 : f32 to vector<2x3x14xf32>
    %313 = arith.mulf %312, %311 : vector<2x3x14xf32>
    %314 = arith.addf %309, %313 : vector<2x3x14xf32>
    %c4_72 = arith.constant 4 : index
    %315 = memref.load %arg3[%c4_72] : memref<16xf32, #tpu.memory_space<smem>>
    %316 = vector.extract_strided_slice %163 {offsets = [0, 0, 0], sizes = [2, 3, 14], strides = [1, 1, 1]} : vector<2x4x15xf32> to vector<2x3x14xf32>
    %317 = vector.broadcast %315 : f32 to vector<2x3x14xf32>
    %318 = arith.mulf %317, %316 : vector<2x3x14xf32>
    %319 = arith.addf %314, %318 : vector<2x3x14xf32>
    %c5_73 = arith.constant 5 : index
    %320 = memref.load %arg3[%c5_73] : memref<16xf32, #tpu.memory_space<smem>>
    %321 = vector.extract_strided_slice %163 {offsets = [0, 0, 1], sizes = [2, 3, 14], strides = [1, 1, 1]} : vector<2x4x15xf32> to vector<2x3x14xf32>
    %322 = vector.broadcast %320 : f32 to vector<2x3x14xf32>
    %323 = arith.mulf %322, %321 : vector<2x3x14xf32>
    %324 = arith.addf %319, %323 : vector<2x3x14xf32>
    %c6_74 = arith.constant 6 : index
    %325 = memref.load %arg3[%c6_74] : memref<16xf32, #tpu.memory_space<smem>>
    %326 = vector.extract_strided_slice %163 {offsets = [0, 1, 0], sizes = [2, 3, 14], strides = [1, 1, 1]} : vector<2x4x15xf32> to vector<2x3x14xf32>
    %327 = vector.broadcast %325 : f32 to vector<2x3x14xf32>
    %328 = arith.mulf %327, %326 : vector<2x3x14xf32>
    %329 = arith.addf %324, %328 : vector<2x3x14xf32>
    %c7_75 = arith.constant 7 : index
    %330 = memref.load %arg3[%c7_75] : memref<16xf32, #tpu.memory_space<smem>>
    %331 = vector.extract_strided_slice %163 {offsets = [0, 1, 1], sizes = [2, 3, 14], strides = [1, 1, 1]} : vector<2x4x15xf32> to vector<2x3x14xf32>
    %332 = vector.broadcast %330 : f32 to vector<2x3x14xf32>
    %333 = arith.mulf %332, %331 : vector<2x3x14xf32>
    %334 = arith.addf %329, %333 : vector<2x3x14xf32>
    %c8_76 = arith.constant 8 : index
    %335 = memref.load %arg3[%c8_76] : memref<16xf32, #tpu.memory_space<smem>>
    %336 = vector.extract_strided_slice %229 {offsets = [0, 0, 0], sizes = [2, 3, 14], strides = [1, 1, 1]} : vector<2x4x15xf32> to vector<2x3x14xf32>
    %337 = vector.broadcast %335 : f32 to vector<2x3x14xf32>
    %338 = arith.mulf %337, %336 : vector<2x3x14xf32>
    %339 = arith.addf %334, %338 : vector<2x3x14xf32>
    %c9_77 = arith.constant 9 : index
    %340 = memref.load %arg3[%c9_77] : memref<16xf32, #tpu.memory_space<smem>>
    %341 = vector.extract_strided_slice %229 {offsets = [0, 0, 1], sizes = [2, 3, 14], strides = [1, 1, 1]} : vector<2x4x15xf32> to vector<2x3x14xf32>
    %342 = vector.broadcast %340 : f32 to vector<2x3x14xf32>
    %343 = arith.mulf %342, %341 : vector<2x3x14xf32>
    %344 = arith.addf %339, %343 : vector<2x3x14xf32>
    %c10_78 = arith.constant 10 : index
    %345 = memref.load %arg3[%c10_78] : memref<16xf32, #tpu.memory_space<smem>>
    %346 = vector.extract_strided_slice %229 {offsets = [0, 1, 0], sizes = [2, 3, 14], strides = [1, 1, 1]} : vector<2x4x15xf32> to vector<2x3x14xf32>
    %347 = vector.broadcast %345 : f32 to vector<2x3x14xf32>
    %348 = arith.mulf %347, %346 : vector<2x3x14xf32>
    %349 = arith.addf %344, %348 : vector<2x3x14xf32>
    %c11_79 = arith.constant 11 : index
    %350 = memref.load %arg3[%c11_79] : memref<16xf32, #tpu.memory_space<smem>>
    %351 = vector.extract_strided_slice %229 {offsets = [0, 1, 1], sizes = [2, 3, 14], strides = [1, 1, 1]} : vector<2x4x15xf32> to vector<2x3x14xf32>
    %352 = vector.broadcast %350 : f32 to vector<2x3x14xf32>
    %353 = arith.mulf %352, %351 : vector<2x3x14xf32>
    %354 = arith.addf %349, %353 : vector<2x3x14xf32>
    %c12_80 = arith.constant 12 : index
    %355 = memref.load %arg3[%c12_80] : memref<16xf32, #tpu.memory_space<smem>>
    %356 = vector.extract_strided_slice %295 {offsets = [0, 0, 0], sizes = [2, 3, 14], strides = [1, 1, 1]} : vector<2x4x15xf32> to vector<2x3x14xf32>
    %357 = vector.broadcast %355 : f32 to vector<2x3x14xf32>
    %358 = arith.mulf %357, %356 : vector<2x3x14xf32>
    %359 = arith.addf %354, %358 : vector<2x3x14xf32>
    %c13_81 = arith.constant 13 : index
    %360 = memref.load %arg3[%c13_81] : memref<16xf32, #tpu.memory_space<smem>>
    %361 = vector.extract_strided_slice %295 {offsets = [0, 0, 1], sizes = [2, 3, 14], strides = [1, 1, 1]} : vector<2x4x15xf32> to vector<2x3x14xf32>
    %362 = vector.broadcast %360 : f32 to vector<2x3x14xf32>
    %363 = arith.mulf %362, %361 : vector<2x3x14xf32>
    %364 = arith.addf %359, %363 : vector<2x3x14xf32>
    %c14_82 = arith.constant 14 : index
    %365 = memref.load %arg3[%c14_82] : memref<16xf32, #tpu.memory_space<smem>>
    %366 = vector.extract_strided_slice %295 {offsets = [0, 1, 0], sizes = [2, 3, 14], strides = [1, 1, 1]} : vector<2x4x15xf32> to vector<2x3x14xf32>
    %367 = vector.broadcast %365 : f32 to vector<2x3x14xf32>
    %368 = arith.mulf %367, %366 : vector<2x3x14xf32>
    %369 = arith.addf %364, %368 : vector<2x3x14xf32>
    %c15_83 = arith.constant 15 : index
    %370 = memref.load %arg3[%c15_83] : memref<16xf32, #tpu.memory_space<smem>>
    %371 = vector.extract_strided_slice %295 {offsets = [0, 1, 1], sizes = [2, 3, 14], strides = [1, 1, 1]} : vector<2x4x15xf32> to vector<2x3x14xf32>
    %372 = vector.broadcast %370 : f32 to vector<2x3x14xf32>
    %373 = arith.mulf %372, %371 : vector<2x3x14xf32>
    %374 = arith.addf %369, %373 : vector<2x3x14xf32>
    %c0_84 = arith.constant 0 : index
    %375 = memref.load %arg4[%c0_84] : memref<1xf32, #tpu.memory_space<smem>>
    %376 = vector.broadcast %375 : f32 to vector<2x3x14xf32>
    %377 = arith.addf %374, %376 : vector<2x3x14xf32>
    %c0_85 = arith.constant 0 : index
    %c0_86 = arith.constant 0 : index
    %c0_87 = arith.constant 0 : index
    %378 = vector.load %arg8[%c0_85, %c0_86, %c0_87] : memref<2x3x14xf32, #tpu.memory_space<vmem>>, vector<2x3x14xf32>
    tpu.vector_store %arg8[%c0_85, %c0_86, %c0_87], %377 {strides = array<i32>} : memref<2x3x14xf32, #tpu.memory_space<vmem>>, vector<2x3x14xf32>,
    %379 = vector.extract_strided_slice %97 {offsets = [0, 0, 0], sizes = [2, 1, 15], strides = [1, 1, 1]} : vector<2x4x15xf32> to vector<2x1x15xf32>
    %380 = vector.extract_strided_slice %163 {offsets = [0, 0, 0], sizes = [2, 1, 15], strides = [1, 1, 1]} : vector<2x4x15xf32> to vector<2x1x15xf32>
    %381 = vector.extract_strided_slice %229 {offsets = [0, 0, 0], sizes = [2, 1, 15], strides = [1, 1, 1]} : vector<2x4x15xf32> to vector<2x1x15xf32>
    %382 = vector.extract_strided_slice %295 {offsets = [0, 0, 0], sizes = [2, 1, 15], strides = [1, 1, 1]} : vector<2x4x15xf32> to vector<2x1x15xf32>
    %383 = tpu.concatenate %379, %380, %381, %382 in 1 : vector<2x1x15xf32>, vector<2x1x15xf32>, vector<2x1x15xf32>, vector<2x1x15xf32> -> vector<2x4x15xf32>
    %384 = vector.extract_strided_slice %97 {offsets = [0, 1, 0], sizes = [2, 1, 15], strides = [1, 1, 1]} : vector<2x4x15xf32> to vector<2x1x15xf32>
    %385 = vector.extract_strided_slice %163 {offsets = [0, 1, 0], sizes = [2, 1, 15], strides = [1, 1, 1]} : vector<2x4x15xf32> to vector<2x1x15xf32>
    %386 = vector.extract_strided_slice %229 {offsets = [0, 1, 0], sizes = [2, 1, 15], strides = [1, 1, 1]} : vector<2x4x15xf32> to vector<2x1x15xf32>
    %387 = vector.extract_strided_slice %295 {offsets = [0, 1, 0], sizes = [2, 1, 15], strides = [1, 1, 1]} : vector<2x4x15xf32> to vector<2x1x15xf32>
    %388 = tpu.concatenate %384, %385, %386, %387 in 1 : vector<2x1x15xf32>, vector<2x1x15xf32>, vector<2x1x15xf32>, vector<2x1x15xf32> -> vector<2x4x15xf32>
    %389 = vector.extract_strided_slice %97 {offsets = [0, 2, 0], sizes = [2, 1, 15], strides = [1, 1, 1]} : vector<2x4x15xf32> to vector<2x1x15xf32>
    %390 = vector.extract_strided_slice %163 {offsets = [0, 2, 0], sizes = [2, 1, 15], strides = [1, 1, 1]} : vector<2x4x15xf32> to vector<2x1x15xf32>
    %391 = vector.extract_strided_slice %229 {offsets = [0, 2, 0], sizes = [2, 1, 15], strides = [1, 1, 1]} : vector<2x4x15xf32> to vector<2x1x15xf32>
    %392 = vector.extract_strided_slice %295 {offsets = [0, 2, 0], sizes = [2, 1, 15], strides = [1, 1, 1]} : vector<2x4x15xf32> to vector<2x1x15xf32>
    %393 = tpu.concatenate %389, %390, %391, %392 in 1 : vector<2x1x15xf32>, vector<2x1x15xf32>, vector<2x1x15xf32>, vector<2x1x15xf32> -> vector<2x4x15xf32>
    %394 = vector.extract_strided_slice %97 {offsets = [0, 3, 0], sizes = [2, 1, 15], strides = [1, 1, 1]} : vector<2x4x15xf32> to vector<2x1x15xf32>
    %395 = vector.extract_strided_slice %163 {offsets = [0, 3, 0], sizes = [2, 1, 15], strides = [1, 1, 1]} : vector<2x4x15xf32> to vector<2x1x15xf32>
    %396 = vector.extract_strided_slice %229 {offsets = [0, 3, 0], sizes = [2, 1, 15], strides = [1, 1, 1]} : vector<2x4x15xf32> to vector<2x1x15xf32>
    %397 = vector.extract_strided_slice %295 {offsets = [0, 3, 0], sizes = [2, 1, 15], strides = [1, 1, 1]} : vector<2x4x15xf32> to vector<2x1x15xf32>
    %398 = tpu.concatenate %394, %395, %396, %397 in 1 : vector<2x1x15xf32>, vector<2x1x15xf32>, vector<2x1x15xf32>, vector<2x1x15xf32> -> vector<2x4x15xf32>
    %c0_88 = arith.constant 0 : index
    %399 = memref.load %arg6[%c0_88] : memref<4xf32, #tpu.memory_space<smem>>
    %400 = vector.broadcast %399 : f32 to vector<2x5x16xf32>
    %c0_89 = arith.constant 0 : index
    %c0_90 = arith.constant 0 : index
    %c0_91 = arith.constant 0 : index
    %c0_92 = arith.constant 0 : index
    %401 = vector.load %arg7[%c0_89, %c0_90, %c0_91, %c0_92] : memref<2x4x5x16xf32, #tpu.memory_space<vmem>>, vector<2x1x5x16xf32>
    %402 = vector.shape_cast %401 : vector<2x1x5x16xf32> to vector<2x5x16xf32>
    %403 = vector.shape_cast %400 : vector<2x5x16xf32> to vector<2x1x5x16xf32>
    tpu.vector_store %arg7[%c0_89, %c0_90, %c0_91, %c0_92], %403 {strides = array<i32>} : memref<2x4x5x16xf32, #tpu.memory_space<vmem>>, vector<2x1x5x16xf32>,
    %c0_93 = arith.constant 0 : index
    %404 = memref.load %arg5[%c0_93] : memref<64xf32, #tpu.memory_space<smem>>
    %405 = vector.broadcast %404 : f32 to vector<2x4x15xf32>
    %406 = arith.mulf %405, %383 : vector<2x4x15xf32>
    %c16_94 = arith.constant 16 : index
    %407 = memref.load %arg5[%c16_94] : memref<64xf32, #tpu.memory_space<smem>>
    %408 = vector.broadcast %407 : f32 to vector<2x4x15xf32>
    %409 = arith.mulf %408, %388 : vector<2x4x15xf32>
    %410 = arith.addf %406, %409 : vector<2x4x15xf32>
    %c32_95 = arith.constant 32 : index
    %411 = memref.load %arg5[%c32_95] : memref<64xf32, #tpu.memory_space<smem>>
    %412 = vector.broadcast %411 : f32 to vector<2x4x15xf32>
    %413 = arith.mulf %412, %393 : vector<2x4x15xf32>
    %414 = arith.addf %410, %413 : vector<2x4x15xf32>
    %c48_96 = arith.constant 48 : index
    %415 = memref.load %arg5[%c48_96] : memref<64xf32, #tpu.memory_space<smem>>
    %416 = vector.broadcast %415 : f32 to vector<2x4x15xf32>
    %417 = arith.mulf %416, %398 : vector<2x4x15xf32>
    %418 = arith.addf %414, %417 : vector<2x4x15xf32>
    %c0_97 = arith.constant 0 : index
    %c0_98 = arith.constant 0 : index
    %c0_99 = arith.constant 0 : index
    %c0_100 = arith.constant 0 : index
    %419 = vector.load %arg7[%c0_97, %c0_98, %c0_99, %c0_100] : memref<2x4x5x16xf32, #tpu.memory_space<vmem>>, vector<2x1x4x15xf32>
    %420 = vector.shape_cast %419 : vector<2x1x4x15xf32> to vector<2x4x15xf32>
    %421 = arith.addf %420, %418 : vector<2x4x15xf32>
    %c0_101 = arith.constant 0 : index
    %c0_102 = arith.constant 0 : index
    %c0_103 = arith.constant 0 : index
    %c0_104 = arith.constant 0 : index
    %422 = vector.load %arg7[%c0_101, %c0_102, %c0_103, %c0_104] : memref<2x4x5x16xf32, #tpu.memory_space<vmem>>, vector<2x1x4x15xf32>
    %423 = vector.shape_cast %422 : vector<2x1x4x15xf32> to vector<2x4x15xf32>
    %424 = vector.shape_cast %421 : vector<2x4x15xf32> to vector<2x1x4x15xf32>
    tpu.vector_store %arg7[%c0_101, %c0_102, %c0_103, %c0_104], %424 {strides = array<i32>} : memref<2x4x5x16xf32, #tpu.memory_space<vmem>>, vector<2x1x4x15xf32>,
    %c1_105 = arith.constant 1 : index
    %425 = memref.load %arg5[%c1_105] : memref<64xf32, #tpu.memory_space<smem>>
    %426 = vector.broadcast %425 : f32 to vector<2x4x15xf32>
    %427 = arith.mulf %426, %383 : vector<2x4x15xf32>
    %c17_106 = arith.constant 17 : index
    %428 = memref.load %arg5[%c17_106] : memref<64xf32, #tpu.memory_space<smem>>
    %429 = vector.broadcast %428 : f32 to vector<2x4x15xf32>
    %430 = arith.mulf %429, %388 : vector<2x4x15xf32>
    %431 = arith.addf %427, %430 : vector<2x4x15xf32>
    %c33_107 = arith.constant 33 : index
    %432 = memref.load %arg5[%c33_107] : memref<64xf32, #tpu.memory_space<smem>>
    %433 = vector.broadcast %432 : f32 to vector<2x4x15xf32>
    %434 = arith.mulf %433, %393 : vector<2x4x15xf32>
    %435 = arith.addf %431, %434 : vector<2x4x15xf32>
    %c49_108 = arith.constant 49 : index
    %436 = memref.load %arg5[%c49_108] : memref<64xf32, #tpu.memory_space<smem>>
    %437 = vector.broadcast %436 : f32 to vector<2x4x15xf32>
    %438 = arith.mulf %437, %398 : vector<2x4x15xf32>
    %439 = arith.addf %435, %438 : vector<2x4x15xf32>
    %c0_109 = arith.constant 0 : index
    %c0_110 = arith.constant 0 : index
    %c0_111 = arith.constant 0 : index
    %c1_112 = arith.constant 1 : index
    %440 = vector.load %arg7[%c0_109, %c0_110, %c0_111, %c1_112] : memref<2x4x5x16xf32, #tpu.memory_space<vmem>>, vector<2x1x4x15xf32>
    %441 = vector.shape_cast %440 : vector<2x1x4x15xf32> to vector<2x4x15xf32>
    %442 = arith.addf %441, %439 : vector<2x4x15xf32>
    %c0_113 = arith.constant 0 : index
    %c0_114 = arith.constant 0 : index
    %c0_115 = arith.constant 0 : index
    %c1_116 = arith.constant 1 : index
    %443 = vector.load %arg7[%c0_113, %c0_114, %c0_115, %c1_116] : memref<2x4x5x16xf32, #tpu.memory_space<vmem>>, vector<2x1x4x15xf32>
    %444 = vector.shape_cast %443 : vector<2x1x4x15xf32> to vector<2x4x15xf32>
    %445 = vector.shape_cast %442 : vector<2x4x15xf32> to vector<2x1x4x15xf32>
    tpu.vector_store %arg7[%c0_113, %c0_114, %c0_115, %c1_116], %445 {strides = array<i32>} : memref<2x4x5x16xf32, #tpu.memory_space<vmem>>, vector<2x1x4x15xf32>,
    %c2_117 = arith.constant 2 : index
    %446 = memref.load %arg5[%c2_117] : memref<64xf32, #tpu.memory_space<smem>>
    %447 = vector.broadcast %446 : f32 to vector<2x4x15xf32>
    %448 = arith.mulf %447, %383 : vector<2x4x15xf32>
    %c18_118 = arith.constant 18 : index
    %449 = memref.load %arg5[%c18_118] : memref<64xf32, #tpu.memory_space<smem>>
    %450 = vector.broadcast %449 : f32 to vector<2x4x15xf32>
    %451 = arith.mulf %450, %388 : vector<2x4x15xf32>
    %452 = arith.addf %448, %451 : vector<2x4x15xf32>
    %c34_119 = arith.constant 34 : index
    %453 = memref.load %arg5[%c34_119] : memref<64xf32, #tpu.memory_space<smem>>
    %454 = vector.broadcast %453 : f32 to vector<2x4x15xf32>
    %455 = arith.mulf %454, %393 : vector<2x4x15xf32>
    %456 = arith.addf %452, %455 : vector<2x4x15xf32>
    %c50_120 = arith.constant 50 : index
    %457 = memref.load %arg5[%c50_120] : memref<64xf32, #tpu.memory_space<smem>>
    %458 = vector.broadcast %457 : f32 to vector<2x4x15xf32>
    %459 = arith.mulf %458, %398 : vector<2x4x15xf32>
    %460 = arith.addf %456, %459 : vector<2x4x15xf32>
    %c0_121 = arith.constant 0 : index
    %c0_122 = arith.constant 0 : index
    %c1_123 = arith.constant 1 : index
    %c0_124 = arith.constant 0 : index
    %461 = vector.load %arg7[%c0_121, %c0_122, %c1_123, %c0_124] : memref<2x4x5x16xf32, #tpu.memory_space<vmem>>, vector<2x1x4x15xf32>
    %462 = vector.shape_cast %461 : vector<2x1x4x15xf32> to vector<2x4x15xf32>
    %463 = arith.addf %462, %460 : vector<2x4x15xf32>
    %c0_125 = arith.constant 0 : index
    %c0_126 = arith.constant 0 : index
    %c1_127 = arith.constant 1 : index
    %c0_128 = arith.constant 0 : index
    %464 = vector.load %arg7[%c0_125, %c0_126, %c1_127, %c0_128] : memref<2x4x5x16xf32, #tpu.memory_space<vmem>>, vector<2x1x4x15xf32>
    %465 = vector.shape_cast %464 : vector<2x1x4x15xf32> to vector<2x4x15xf32>
    %466 = vector.shape_cast %463 : vector<2x4x15xf32> to vector<2x1x4x15xf32>
    tpu.vector_store %arg7[%c0_125, %c0_126, %c1_127, %c0_128], %466 {strides = array<i32>} : memref<2x4x5x16xf32, #tpu.memory_space<vmem>>, vector<2x1x4x15xf32>,
    %c3_129 = arith.constant 3 : index
    %467 = memref.load %arg5[%c3_129] : memref<64xf32, #tpu.memory_space<smem>>
    %468 = vector.broadcast %467 : f32 to vector<2x4x15xf32>
    %469 = arith.mulf %468, %383 : vector<2x4x15xf32>
    %c19_130 = arith.constant 19 : index
    %470 = memref.load %arg5[%c19_130] : memref<64xf32, #tpu.memory_space<smem>>
    %471 = vector.broadcast %470 : f32 to vector<2x4x15xf32>
    %472 = arith.mulf %471, %388 : vector<2x4x15xf32>
    %473 = arith.addf %469, %472 : vector<2x4x15xf32>
    %c35_131 = arith.constant 35 : index
    %474 = memref.load %arg5[%c35_131] : memref<64xf32, #tpu.memory_space<smem>>
    %475 = vector.broadcast %474 : f32 to vector<2x4x15xf32>
    %476 = arith.mulf %475, %393 : vector<2x4x15xf32>
    %477 = arith.addf %473, %476 : vector<2x4x15xf32>
    %c51_132 = arith.constant 51 : index
    %478 = memref.load %arg5[%c51_132] : memref<64xf32, #tpu.memory_space<smem>>
    %479 = vector.broadcast %478 : f32 to vector<2x4x15xf32>
    %480 = arith.mulf %479, %398 : vector<2x4x15xf32>
    %481 = arith.addf %477, %480 : vector<2x4x15xf32>
    %c0_133 = arith.constant 0 : index
    %c0_134 = arith.constant 0 : index
    %c1_135 = arith.constant 1 : index
    %c1_136 = arith.constant 1 : index
    %482 = vector.load %arg7[%c0_133, %c0_134, %c1_135, %c1_136] : memref<2x4x5x16xf32, #tpu.memory_space<vmem>>, vector<2x1x4x15xf32>
    %483 = vector.shape_cast %482 : vector<2x1x4x15xf32> to vector<2x4x15xf32>
    %484 = arith.addf %483, %481 : vector<2x4x15xf32>
    %c0_137 = arith.constant 0 : index
    %c0_138 = arith.constant 0 : index
    %c1_139 = arith.constant 1 : index
    %c1_140 = arith.constant 1 : index
    %485 = vector.load %arg7[%c0_137, %c0_138, %c1_139, %c1_140] : memref<2x4x5x16xf32, #tpu.memory_space<vmem>>, vector<2x1x4x15xf32>
    %486 = vector.shape_cast %485 : vector<2x1x4x15xf32> to vector<2x4x15xf32>
    %487 = vector.shape_cast %484 : vector<2x4x15xf32> to vector<2x1x4x15xf32>
    tpu.vector_store %arg7[%c0_137, %c0_138, %c1_139, %c1_140], %487 {strides = array<i32>} : memref<2x4x5x16xf32, #tpu.memory_space<vmem>>, vector<2x1x4x15xf32>,
    %c1_141 = arith.constant 1 : index
    %488 = memref.load %arg6[%c1_141] : memref<4xf32, #tpu.memory_space<smem>>
    %489 = vector.broadcast %488 : f32 to vector<2x5x16xf32>
    %c0_142 = arith.constant 0 : index
    %c1_143 = arith.constant 1 : index
    %c0_144 = arith.constant 0 : index
    %c0_145 = arith.constant 0 : index
    %490 = vector.load %arg7[%c0_142, %c1_143, %c0_144, %c0_145] : memref<2x4x5x16xf32, #tpu.memory_space<vmem>>, vector<2x1x5x16xf32>
    %491 = vector.shape_cast %490 : vector<2x1x5x16xf32> to vector<2x5x16xf32>
    %492 = vector.shape_cast %489 : vector<2x5x16xf32> to vector<2x1x5x16xf32>
    tpu.vector_store %arg7[%c0_142, %c1_143, %c0_144, %c0_145], %492 {strides = array<i32>} : memref<2x4x5x16xf32, #tpu.memory_space<vmem>>, vector<2x1x5x16xf32>,
    %c4_146 = arith.constant 4 : index
    %493 = memref.load %arg5[%c4_146] : memref<64xf32, #tpu.memory_space<smem>>
    %494 = vector.broadcast %493 : f32 to vector<2x4x15xf32>
    %495 = arith.mulf %494, %383 : vector<2x4x15xf32>
    %c20_147 = arith.constant 20 : index
    %496 = memref.load %arg5[%c20_147] : memref<64xf32, #tpu.memory_space<smem>>
    %497 = vector.broadcast %496 : f32 to vector<2x4x15xf32>
    %498 = arith.mulf %497, %388 : vector<2x4x15xf32>
    %499 = arith.addf %495, %498 : vector<2x4x15xf32>
    %c36_148 = arith.constant 36 : index
    %500 = memref.load %arg5[%c36_148] : memref<64xf32, #tpu.memory_space<smem>>
    %501 = vector.broadcast %500 : f32 to vector<2x4x15xf32>
    %502 = arith.mulf %501, %393 : vector<2x4x15xf32>
    %503 = arith.addf %499, %502 : vector<2x4x15xf32>
    %c52_149 = arith.constant 52 : index
    %504 = memref.load %arg5[%c52_149] : memref<64xf32, #tpu.memory_space<smem>>
    %505 = vector.broadcast %504 : f32 to vector<2x4x15xf32>
    %506 = arith.mulf %505, %398 : vector<2x4x15xf32>
    %507 = arith.addf %503, %506 : vector<2x4x15xf32>
    %c0_150 = arith.constant 0 : index
    %c1_151 = arith.constant 1 : index
    %c0_152 = arith.constant 0 : index
    %c0_153 = arith.constant 0 : index
    %508 = vector.load %arg7[%c0_150, %c1_151, %c0_152, %c0_153] : memref<2x4x5x16xf32, #tpu.memory_space<vmem>>, vector<2x1x4x15xf32>
    %509 = vector.shape_cast %508 : vector<2x1x4x15xf32> to vector<2x4x15xf32>
    %510 = arith.addf %509, %507 : vector<2x4x15xf32>
    %c0_154 = arith.constant 0 : index
    %c1_155 = arith.constant 1 : index
    %c0_156 = arith.constant 0 : index
    %c0_157 = arith.constant 0 : index
    %511 = vector.load %arg7[%c0_154, %c1_155, %c0_156, %c0_157] : memref<2x4x5x16xf32, #tpu.memory_space<vmem>>, vector<2x1x4x15xf32>
    %512 = vector.shape_cast %511 : vector<2x1x4x15xf32> to vector<2x4x15xf32>
    %513 = vector.shape_cast %510 : vector<2x4x15xf32> to vector<2x1x4x15xf32>
    tpu.vector_store %arg7[%c0_154, %c1_155, %c0_156, %c0_157], %513 {strides = array<i32>} : memref<2x4x5x16xf32, #tpu.memory_space<vmem>>, vector<2x1x4x15xf32>,
    %c5_158 = arith.constant 5 : index
    %514 = memref.load %arg5[%c5_158] : memref<64xf32, #tpu.memory_space<smem>>
    %515 = vector.broadcast %514 : f32 to vector<2x4x15xf32>
    %516 = arith.mulf %515, %383 : vector<2x4x15xf32>
    %c21_159 = arith.constant 21 : index
    %517 = memref.load %arg5[%c21_159] : memref<64xf32, #tpu.memory_space<smem>>
    %518 = vector.broadcast %517 : f32 to vector<2x4x15xf32>
    %519 = arith.mulf %518, %388 : vector<2x4x15xf32>
    %520 = arith.addf %516, %519 : vector<2x4x15xf32>
    %c37_160 = arith.constant 37 : index
    %521 = memref.load %arg5[%c37_160] : memref<64xf32, #tpu.memory_space<smem>>
    %522 = vector.broadcast %521 : f32 to vector<2x4x15xf32>
    %523 = arith.mulf %522, %393 : vector<2x4x15xf32>
    %524 = arith.addf %520, %523 : vector<2x4x15xf32>
    %c53_161 = arith.constant 53 : index
    %525 = memref.load %arg5[%c53_161] : memref<64xf32, #tpu.memory_space<smem>>
    %526 = vector.broadcast %525 : f32 to vector<2x4x15xf32>
    %527 = arith.mulf %526, %398 : vector<2x4x15xf32>
    %528 = arith.addf %524, %527 : vector<2x4x15xf32>
    %c0_162 = arith.constant 0 : index
    %c1_163 = arith.constant 1 : index
    %c0_164 = arith.constant 0 : index
    %c1_165 = arith.constant 1 : index
    %529 = vector.load %arg7[%c0_162, %c1_163, %c0_164, %c1_165] : memref<2x4x5x16xf32, #tpu.memory_space<vmem>>, vector<2x1x4x15xf32>
    %530 = vector.shape_cast %529 : vector<2x1x4x15xf32> to vector<2x4x15xf32>
    %531 = arith.addf %530, %528 : vector<2x4x15xf32>
    %c0_166 = arith.constant 0 : index
    %c1_167 = arith.constant 1 : index
    %c0_168 = arith.constant 0 : index
    %c1_169 = arith.constant 1 : index
    %532 = vector.load %arg7[%c0_166, %c1_167, %c0_168, %c1_169] : memref<2x4x5x16xf32, #tpu.memory_space<vmem>>, vector<2x1x4x15xf32>
    %533 = vector.shape_cast %532 : vector<2x1x4x15xf32> to vector<2x4x15xf32>
    %534 = vector.shape_cast %531 : vector<2x4x15xf32> to vector<2x1x4x15xf32>
    tpu.vector_store %arg7[%c0_166, %c1_167, %c0_168, %c1_169], %534 {strides = array<i32>} : memref<2x4x5x16xf32, #tpu.memory_space<vmem>>, vector<2x1x4x15xf32>,
    %c6_170 = arith.constant 6 : index
    %535 = memref.load %arg5[%c6_170] : memref<64xf32, #tpu.memory_space<smem>>
    %536 = vector.broadcast %535 : f32 to vector<2x4x15xf32>
    %537 = arith.mulf %536, %383 : vector<2x4x15xf32>
    %c22_171 = arith.constant 22 : index
    %538 = memref.load %arg5[%c22_171] : memref<64xf32, #tpu.memory_space<smem>>
    %539 = vector.broadcast %538 : f32 to vector<2x4x15xf32>
    %540 = arith.mulf %539, %388 : vector<2x4x15xf32>
    %541 = arith.addf %537, %540 : vector<2x4x15xf32>
    %c38_172 = arith.constant 38 : index
    %542 = memref.load %arg5[%c38_172] : memref<64xf32, #tpu.memory_space<smem>>
    %543 = vector.broadcast %542 : f32 to vector<2x4x15xf32>
    %544 = arith.mulf %543, %393 : vector<2x4x15xf32>
    %545 = arith.addf %541, %544 : vector<2x4x15xf32>
    %c54_173 = arith.constant 54 : index
    %546 = memref.load %arg5[%c54_173] : memref<64xf32, #tpu.memory_space<smem>>
    %547 = vector.broadcast %546 : f32 to vector<2x4x15xf32>
    %548 = arith.mulf %547, %398 : vector<2x4x15xf32>
    %549 = arith.addf %545, %548 : vector<2x4x15xf32>
    %c0_174 = arith.constant 0 : index
    %c1_175 = arith.constant 1 : index
    %c1_176 = arith.constant 1 : index
    %c0_177 = arith.constant 0 : index
    %550 = vector.load %arg7[%c0_174, %c1_175, %c1_176, %c0_177] : memref<2x4x5x16xf32, #tpu.memory_space<vmem>>, vector<2x1x4x15xf32>
    %551 = vector.shape_cast %550 : vector<2x1x4x15xf32> to vector<2x4x15xf32>
    %552 = arith.addf %551, %549 : vector<2x4x15xf32>
    %c0_178 = arith.constant 0 : index
    %c1_179 = arith.constant 1 : index
    %c1_180 = arith.constant 1 : index
    %c0_181 = arith.constant 0 : index
    %553 = vector.load %arg7[%c0_178, %c1_179, %c1_180, %c0_181] : memref<2x4x5x16xf32, #tpu.memory_space<vmem>>, vector<2x1x4x15xf32>
    %554 = vector.shape_cast %553 : vector<2x1x4x15xf32> to vector<2x4x15xf32>
    %555 = vector.shape_cast %552 : vector<2x4x15xf32> to vector<2x1x4x15xf32>
    tpu.vector_store %arg7[%c0_178, %c1_179, %c1_180, %c0_181], %555 {strides = array<i32>} : memref<2x4x5x16xf32, #tpu.memory_space<vmem>>, vector<2x1x4x15xf32>,
    %c7_182 = arith.constant 7 : index
    %556 = memref.load %arg5[%c7_182] : memref<64xf32, #tpu.memory_space<smem>>
    %557 = vector.broadcast %556 : f32 to vector<2x4x15xf32>
    %558 = arith.mulf %557, %383 : vector<2x4x15xf32>
    %c23_183 = arith.constant 23 : index
    %559 = memref.load %arg5[%c23_183] : memref<64xf32, #tpu.memory_space<smem>>
    %560 = vector.broadcast %559 : f32 to vector<2x4x15xf32>
    %561 = arith.mulf %560, %388 : vector<2x4x15xf32>
    %562 = arith.addf %558, %561 : vector<2x4x15xf32>
    %c39_184 = arith.constant 39 : index
    %563 = memref.load %arg5[%c39_184] : memref<64xf32, #tpu.memory_space<smem>>
    %564 = vector.broadcast %563 : f32 to vector<2x4x15xf32>
    %565 = arith.mulf %564, %393 : vector<2x4x15xf32>
    %566 = arith.addf %562, %565 : vector<2x4x15xf32>
    %c55_185 = arith.constant 55 : index
    %567 = memref.load %arg5[%c55_185] : memref<64xf32, #tpu.memory_space<smem>>
    %568 = vector.broadcast %567 : f32 to vector<2x4x15xf32>
    %569 = arith.mulf %568, %398 : vector<2x4x15xf32>
    %570 = arith.addf %566, %569 : vector<2x4x15xf32>
    %c0_186 = arith.constant 0 : index
    %c1_187 = arith.constant 1 : index
    %c1_188 = arith.constant 1 : index
    %c1_189 = arith.constant 1 : index
    %571 = vector.load %arg7[%c0_186, %c1_187, %c1_188, %c1_189] : memref<2x4x5x16xf32, #tpu.memory_space<vmem>>, vector<2x1x4x15xf32>
    %572 = vector.shape_cast %571 : vector<2x1x4x15xf32> to vector<2x4x15xf32>
    %573 = arith.addf %572, %570 : vector<2x4x15xf32>
    %c0_190 = arith.constant 0 : index
    %c1_191 = arith.constant 1 : index
    %c1_192 = arith.constant 1 : index
    %c1_193 = arith.constant 1 : index
    %574 = vector.load %arg7[%c0_190, %c1_191, %c1_192, %c1_193] : memref<2x4x5x16xf32, #tpu.memory_space<vmem>>, vector<2x1x4x15xf32>
    %575 = vector.shape_cast %574 : vector<2x1x4x15xf32> to vector<2x4x15xf32>
    %576 = vector.shape_cast %573 : vector<2x4x15xf32> to vector<2x1x4x15xf32>
    tpu.vector_store %arg7[%c0_190, %c1_191, %c1_192, %c1_193], %576 {strides = array<i32>} : memref<2x4x5x16xf32, #tpu.memory_space<vmem>>, vector<2x1x4x15xf32>,
    %c2_194 = arith.constant 2 : index
    %577 = memref.load %arg6[%c2_194] : memref<4xf32, #tpu.memory_space<smem>>
    %578 = vector.broadcast %577 : f32 to vector<2x5x16xf32>
    %c0_195 = arith.constant 0 : index
    %c2_196 = arith.constant 2 : index
    %c0_197 = arith.constant 0 : index
    %c0_198 = arith.constant 0 : index
    %579 = vector.load %arg7[%c0_195, %c2_196, %c0_197, %c0_198] : memref<2x4x5x16xf32, #tpu.memory_space<vmem>>, vector<2x1x5x16xf32>
    %580 = vector.shape_cast %579 : vector<2x1x5x16xf32> to vector<2x5x16xf32>
    %581 = vector.shape_cast %578 : vector<2x5x16xf32> to vector<2x1x5x16xf32>
    tpu.vector_store %arg7[%c0_195, %c2_196, %c0_197, %c0_198], %581 {strides = array<i32>} : memref<2x4x5x16xf32, #tpu.memory_space<vmem>>, vector<2x1x5x16xf32>,
    %c8_199 = arith.constant 8 : index
    %582 = memref.load %arg5[%c8_199] : memref<64xf32, #tpu.memory_space<smem>>
    %583 = vector.broadcast %582 : f32 to vector<2x4x15xf32>
    %584 = arith.mulf %583, %383 : vector<2x4x15xf32>
    %c24_200 = arith.constant 24 : index
    %585 = memref.load %arg5[%c24_200] : memref<64xf32, #tpu.memory_space<smem>>
    %586 = vector.broadcast %585 : f32 to vector<2x4x15xf32>
    %587 = arith.mulf %586, %388 : vector<2x4x15xf32>
    %588 = arith.addf %584, %587 : vector<2x4x15xf32>
    %c40_201 = arith.constant 40 : index
    %589 = memref.load %arg5[%c40_201] : memref<64xf32, #tpu.memory_space<smem>>
    %590 = vector.broadcast %589 : f32 to vector<2x4x15xf32>
    %591 = arith.mulf %590, %393 : vector<2x4x15xf32>
    %592 = arith.addf %588, %591 : vector<2x4x15xf32>
    %c56_202 = arith.constant 56 : index
    %593 = memref.load %arg5[%c56_202] : memref<64xf32, #tpu.memory_space<smem>>
    %594 = vector.broadcast %593 : f32 to vector<2x4x15xf32>
    %595 = arith.mulf %594, %398 : vector<2x4x15xf32>
    %596 = arith.addf %592, %595 : vector<2x4x15xf32>
    %c0_203 = arith.constant 0 : index
    %c2_204 = arith.constant 2 : index
    %c0_205 = arith.constant 0 : index
    %c0_206 = arith.constant 0 : index
    %597 = vector.load %arg7[%c0_203, %c2_204, %c0_205, %c0_206] : memref<2x4x5x16xf32, #tpu.memory_space<vmem>>, vector<2x1x4x15xf32>
    %598 = vector.shape_cast %597 : vector<2x1x4x15xf32> to vector<2x4x15xf32>
    %599 = arith.addf %598, %596 : vector<2x4x15xf32>
    %c0_207 = arith.constant 0 : index
    %c2_208 = arith.constant 2 : index
    %c0_209 = arith.constant 0 : index
    %c0_210 = arith.constant 0 : index
    %600 = vector.load %arg7[%c0_207, %c2_208, %c0_209, %c0_210] : memref<2x4x5x16xf32, #tpu.memory_space<vmem>>, vector<2x1x4x15xf32>
    %601 = vector.shape_cast %600 : vector<2x1x4x15xf32> to vector<2x4x15xf32>
    %602 = vector.shape_cast %599 : vector<2x4x15xf32> to vector<2x1x4x15xf32>
    tpu.vector_store %arg7[%c0_207, %c2_208, %c0_209, %c0_210], %602 {strides = array<i32>} : memref<2x4x5x16xf32, #tpu.memory_space<vmem>>, vector<2x1x4x15xf32>,
    %c9_211 = arith.constant 9 : index
    %603 = memref.load %arg5[%c9_211] : memref<64xf32, #tpu.memory_space<smem>>
    %604 = vector.broadcast %603 : f32 to vector<2x4x15xf32>
    %605 = arith.mulf %604, %383 : vector<2x4x15xf32>
    %c25_212 = arith.constant 25 : index
    %606 = memref.load %arg5[%c25_212] : memref<64xf32, #tpu.memory_space<smem>>
    %607 = vector.broadcast %606 : f32 to vector<2x4x15xf32>
    %608 = arith.mulf %607, %388 : vector<2x4x15xf32>
    %609 = arith.addf %605, %608 : vector<2x4x15xf32>
    %c41_213 = arith.constant 41 : index
    %610 = memref.load %arg5[%c41_213] : memref<64xf32, #tpu.memory_space<smem>>
    %611 = vector.broadcast %610 : f32 to vector<2x4x15xf32>
    %612 = arith.mulf %611, %393 : vector<2x4x15xf32>
    %613 = arith.addf %609, %612 : vector<2x4x15xf32>
    %c57_214 = arith.constant 57 : index
    %614 = memref.load %arg5[%c57_214] : memref<64xf32, #tpu.memory_space<smem>>
    %615 = vector.broadcast %614 : f32 to vector<2x4x15xf32>
    %616 = arith.mulf %615, %398 : vector<2x4x15xf32>
    %617 = arith.addf %613, %616 : vector<2x4x15xf32>
    %c0_215 = arith.constant 0 : index
    %c2_216 = arith.constant 2 : index
    %c0_217 = arith.constant 0 : index
    %c1_218 = arith.constant 1 : index
    %618 = vector.load %arg7[%c0_215, %c2_216, %c0_217, %c1_218] : memref<2x4x5x16xf32, #tpu.memory_space<vmem>>, vector<2x1x4x15xf32>
    %619 = vector.shape_cast %618 : vector<2x1x4x15xf32> to vector<2x4x15xf32>
    %620 = arith.addf %619, %617 : vector<2x4x15xf32>
    %c0_219 = arith.constant 0 : index
    %c2_220 = arith.constant 2 : index
    %c0_221 = arith.constant 0 : index
    %c1_222 = arith.constant 1 : index
    %621 = vector.load %arg7[%c0_219, %c2_220, %c0_221, %c1_222] : memref<2x4x5x16xf32, #tpu.memory_space<vmem>>, vector<2x1x4x15xf32>
    %622 = vector.shape_cast %621 : vector<2x1x4x15xf32> to vector<2x4x15xf32>
    %623 = vector.shape_cast %620 : vector<2x4x15xf32> to vector<2x1x4x15xf32>
    tpu.vector_store %arg7[%c0_219, %c2_220, %c0_221, %c1_222], %623 {strides = array<i32>} : memref<2x4x5x16xf32, #tpu.memory_space<vmem>>, vector<2x1x4x15xf32>,
    %c10_223 = arith.constant 10 : index
    %624 = memref.load %arg5[%c10_223] : memref<64xf32, #tpu.memory_space<smem>>
    %625 = vector.broadcast %624 : f32 to vector<2x4x15xf32>
    %626 = arith.mulf %625, %383 : vector<2x4x15xf32>
    %c26_224 = arith.constant 26 : index
    %627 = memref.load %arg5[%c26_224] : memref<64xf32, #tpu.memory_space<smem>>
    %628 = vector.broadcast %627 : f32 to vector<2x4x15xf32>
    %629 = arith.mulf %628, %388 : vector<2x4x15xf32>
    %630 = arith.addf %626, %629 : vector<2x4x15xf32>
    %c42_225 = arith.constant 42 : index
    %631 = memref.load %arg5[%c42_225] : memref<64xf32, #tpu.memory_space<smem>>
    %632 = vector.broadcast %631 : f32 to vector<2x4x15xf32>
    %633 = arith.mulf %632, %393 : vector<2x4x15xf32>
    %634 = arith.addf %630, %633 : vector<2x4x15xf32>
    %c58_226 = arith.constant 58 : index
    %635 = memref.load %arg5[%c58_226] : memref<64xf32, #tpu.memory_space<smem>>
    %636 = vector.broadcast %635 : f32 to vector<2x4x15xf32>
    %637 = arith.mulf %636, %398 : vector<2x4x15xf32>
    %638 = arith.addf %634, %637 : vector<2x4x15xf32>
    %c0_227 = arith.constant 0 : index
    %c2_228 = arith.constant 2 : index
    %c1_229 = arith.constant 1 : index
    %c0_230 = arith.constant 0 : index
    %639 = vector.load %arg7[%c0_227, %c2_228, %c1_229, %c0_230] : memref<2x4x5x16xf32, #tpu.memory_space<vmem>>, vector<2x1x4x15xf32>
    %640 = vector.shape_cast %639 : vector<2x1x4x15xf32> to vector<2x4x15xf32>
    %641 = arith.addf %640, %638 : vector<2x4x15xf32>
    %c0_231 = arith.constant 0 : index
    %c2_232 = arith.constant 2 : index
    %c1_233 = arith.constant 1 : index
    %c0_234 = arith.constant 0 : index
    %642 = vector.load %arg7[%c0_231, %c2_232, %c1_233, %c0_234] : memref<2x4x5x16xf32, #tpu.memory_space<vmem>>, vector<2x1x4x15xf32>
    %643 = vector.shape_cast %642 : vector<2x1x4x15xf32> to vector<2x4x15xf32>
    %644 = vector.shape_cast %641 : vector<2x4x15xf32> to vector<2x1x4x15xf32>
    tpu.vector_store %arg7[%c0_231, %c2_232, %c1_233, %c0_234], %644 {strides = array<i32>} : memref<2x4x5x16xf32, #tpu.memory_space<vmem>>, vector<2x1x4x15xf32>,
    %c11_235 = arith.constant 11 : index
    %645 = memref.load %arg5[%c11_235] : memref<64xf32, #tpu.memory_space<smem>>
    %646 = vector.broadcast %645 : f32 to vector<2x4x15xf32>
    %647 = arith.mulf %646, %383 : vector<2x4x15xf32>
    %c27_236 = arith.constant 27 : index
    %648 = memref.load %arg5[%c27_236] : memref<64xf32, #tpu.memory_space<smem>>
    %649 = vector.broadcast %648 : f32 to vector<2x4x15xf32>
    %650 = arith.mulf %649, %388 : vector<2x4x15xf32>
    %651 = arith.addf %647, %650 : vector<2x4x15xf32>
    %c43_237 = arith.constant 43 : index
    %652 = memref.load %arg5[%c43_237] : memref<64xf32, #tpu.memory_space<smem>>
    %653 = vector.broadcast %652 : f32 to vector<2x4x15xf32>
    %654 = arith.mulf %653, %393 : vector<2x4x15xf32>
    %655 = arith.addf %651, %654 : vector<2x4x15xf32>
    %c59_238 = arith.constant 59 : index
    %656 = memref.load %arg5[%c59_238] : memref<64xf32, #tpu.memory_space<smem>>
    %657 = vector.broadcast %656 : f32 to vector<2x4x15xf32>
    %658 = arith.mulf %657, %398 : vector<2x4x15xf32>
    %659 = arith.addf %655, %658 : vector<2x4x15xf32>
    %c0_239 = arith.constant 0 : index
    %c2_240 = arith.constant 2 : index
    %c1_241 = arith.constant 1 : index
    %c1_242 = arith.constant 1 : index
    %660 = vector.load %arg7[%c0_239, %c2_240, %c1_241, %c1_242] : memref<2x4x5x16xf32, #tpu.memory_space<vmem>>, vector<2x1x4x15xf32>
    %661 = vector.shape_cast %660 : vector<2x1x4x15xf32> to vector<2x4x15xf32>
    %662 = arith.addf %661, %659 : vector<2x4x15xf32>
    %c0_243 = arith.constant 0 : index
    %c2_244 = arith.constant 2 : index
    %c1_245 = arith.constant 1 : index
    %c1_246 = arith.constant 1 : index
    %663 = vector.load %arg7[%c0_243, %c2_244, %c1_245, %c1_246] : memref<2x4x5x16xf32, #tpu.memory_space<vmem>>, vector<2x1x4x15xf32>
    %664 = vector.shape_cast %663 : vector<2x1x4x15xf32> to vector<2x4x15xf32>
    %665 = vector.shape_cast %662 : vector<2x4x15xf32> to vector<2x1x4x15xf32>
    tpu.vector_store %arg7[%c0_243, %c2_244, %c1_245, %c1_246], %665 {strides = array<i32>} : memref<2x4x5x16xf32, #tpu.memory_space<vmem>>, vector<2x1x4x15xf32>,
    %c3_247 = arith.constant 3 : index
    %666 = memref.load %arg6[%c3_247] : memref<4xf32, #tpu.memory_space<smem>>
    %667 = vector.broadcast %666 : f32 to vector<2x5x16xf32>
    %c0_248 = arith.constant 0 : index
    %c3_249 = arith.constant 3 : index
    %c0_250 = arith.constant 0 : index
    %c0_251 = arith.constant 0 : index
    %668 = vector.load %arg7[%c0_248, %c3_249, %c0_250, %c0_251] : memref<2x4x5x16xf32, #tpu.memory_space<vmem>>, vector<2x1x5x16xf32>
    %669 = vector.shape_cast %668 : vector<2x1x5x16xf32> to vector<2x5x16xf32>
    %670 = vector.shape_cast %667 : vector<2x5x16xf32> to vector<2x1x5x16xf32>
    tpu.vector_store %arg7[%c0_248, %c3_249, %c0_250, %c0_251], %670 {strides = array<i32>} : memref<2x4x5x16xf32, #tpu.memory_space<vmem>>, vector<2x1x5x16xf32>,
    %c12_252 = arith.constant 12 : index
    %671 = memref.load %arg5[%c12_252] : memref<64xf32, #tpu.memory_space<smem>>
    %672 = vector.broadcast %671 : f32 to vector<2x4x15xf32>
    %673 = arith.mulf %672, %383 : vector<2x4x15xf32>
    %c28_253 = arith.constant 28 : index
    %674 = memref.load %arg5[%c28_253] : memref<64xf32, #tpu.memory_space<smem>>
    %675 = vector.broadcast %674 : f32 to vector<2x4x15xf32>
    %676 = arith.mulf %675, %388 : vector<2x4x15xf32>
    %677 = arith.addf %673, %676 : vector<2x4x15xf32>
    %c44_254 = arith.constant 44 : index
    %678 = memref.load %arg5[%c44_254] : memref<64xf32, #tpu.memory_space<smem>>
    %679 = vector.broadcast %678 : f32 to vector<2x4x15xf32>
    %680 = arith.mulf %679, %393 : vector<2x4x15xf32>
    %681 = arith.addf %677, %680 : vector<2x4x15xf32>
    %c60_255 = arith.constant 60 : index
    %682 = memref.load %arg5[%c60_255] : memref<64xf32, #tpu.memory_space<smem>>
    %683 = vector.broadcast %682 : f32 to vector<2x4x15xf32>
    %684 = arith.mulf %683, %398 : vector<2x4x15xf32>
    %685 = arith.addf %681, %684 : vector<2x4x15xf32>
    %c0_256 = arith.constant 0 : index
    %c3_257 = arith.constant 3 : index
    %c0_258 = arith.constant 0 : index
    %c0_259 = arith.constant 0 : index
    %686 = vector.load %arg7[%c0_256, %c3_257, %c0_258, %c0_259] : memref<2x4x5x16xf32, #tpu.memory_space<vmem>>, vector<2x1x4x15xf32>
    %687 = vector.shape_cast %686 : vector<2x1x4x15xf32> to vector<2x4x15xf32>
    %688 = arith.addf %687, %685 : vector<2x4x15xf32>
    %c0_260 = arith.constant 0 : index
    %c3_261 = arith.constant 3 : index
    %c0_262 = arith.constant 0 : index
    %c0_263 = arith.constant 0 : index
    %689 = vector.load %arg7[%c0_260, %c3_261, %c0_262, %c0_263] : memref<2x4x5x16xf32, #tpu.memory_space<vmem>>, vector<2x1x4x15xf32>
    %690 = vector.shape_cast %689 : vector<2x1x4x15xf32> to vector<2x4x15xf32>
    %691 = vector.shape_cast %688 : vector<2x4x15xf32> to vector<2x1x4x15xf32>
    tpu.vector_store %arg7[%c0_260, %c3_261, %c0_262, %c0_263], %691 {strides = array<i32>} : memref<2x4x5x16xf32, #tpu.memory_space<vmem>>, vector<2x1x4x15xf32>,
    %c13_264 = arith.constant 13 : index
    %692 = memref.load %arg5[%c13_264] : memref<64xf32, #tpu.memory_space<smem>>
    %693 = vector.broadcast %692 : f32 to vector<2x4x15xf32>
    %694 = arith.mulf %693, %383 : vector<2x4x15xf32>
    %c29_265 = arith.constant 29 : index
    %695 = memref.load %arg5[%c29_265] : memref<64xf32, #tpu.memory_space<smem>>
    %696 = vector.broadcast %695 : f32 to vector<2x4x15xf32>
    %697 = arith.mulf %696, %388 : vector<2x4x15xf32>
    %698 = arith.addf %694, %697 : vector<2x4x15xf32>
    %c45_266 = arith.constant 45 : index
    %699 = memref.load %arg5[%c45_266] : memref<64xf32, #tpu.memory_space<smem>>
    %700 = vector.broadcast %699 : f32 to vector<2x4x15xf32>
    %701 = arith.mulf %700, %393 : vector<2x4x15xf32>
    %702 = arith.addf %698, %701 : vector<2x4x15xf32>
    %c61_267 = arith.constant 61 : index
    %703 = memref.load %arg5[%c61_267] : memref<64xf32, #tpu.memory_space<smem>>
    %704 = vector.broadcast %703 : f32 to vector<2x4x15xf32>
    %705 = arith.mulf %704, %398 : vector<2x4x15xf32>
    %706 = arith.addf %702, %705 : vector<2x4x15xf32>
    %c0_268 = arith.constant 0 : index
    %c3_269 = arith.constant 3 : index
    %c0_270 = arith.constant 0 : index
    %c1_271 = arith.constant 1 : index
    %707 = vector.load %arg7[%c0_268, %c3_269, %c0_270, %c1_271] : memref<2x4x5x16xf32, #tpu.memory_space<vmem>>, vector<2x1x4x15xf32>
    %708 = vector.shape_cast %707 : vector<2x1x4x15xf32> to vector<2x4x15xf32>
    %709 = arith.addf %708, %706 : vector<2x4x15xf32>
    %c0_272 = arith.constant 0 : index
    %c3_273 = arith.constant 3 : index
    %c0_274 = arith.constant 0 : index
    %c1_275 = arith.constant 1 : index
    %710 = vector.load %arg7[%c0_272, %c3_273, %c0_274, %c1_275] : memref<2x4x5x16xf32, #tpu.memory_space<vmem>>, vector<2x1x4x15xf32>
    %711 = vector.shape_cast %710 : vector<2x1x4x15xf32> to vector<2x4x15xf32>
    %712 = vector.shape_cast %709 : vector<2x4x15xf32> to vector<2x1x4x15xf32>
    tpu.vector_store %arg7[%c0_272, %c3_273, %c0_274, %c1_275], %712 {strides = array<i32>} : memref<2x4x5x16xf32, #tpu.memory_space<vmem>>, vector<2x1x4x15xf32>,
    %c14_276 = arith.constant 14 : index
    %713 = memref.load %arg5[%c14_276] : memref<64xf32, #tpu.memory_space<smem>>
    %714 = vector.broadcast %713 : f32 to vector<2x4x15xf32>
    %715 = arith.mulf %714, %383 : vector<2x4x15xf32>
    %c30_277 = arith.constant 30 : index
    %716 = memref.load %arg5[%c30_277] : memref<64xf32, #tpu.memory_space<smem>>
    %717 = vector.broadcast %716 : f32 to vector<2x4x15xf32>
    %718 = arith.mulf %717, %388 : vector<2x4x15xf32>
    %719 = arith.addf %715, %718 : vector<2x4x15xf32>
    %c46_278 = arith.constant 46 : index
    %720 = memref.load %arg5[%c46_278] : memref<64xf32, #tpu.memory_space<smem>>
    %721 = vector.broadcast %720 : f32 to vector<2x4x15xf32>
    %722 = arith.mulf %721, %393 : vector<2x4x15xf32>
    %723 = arith.addf %719, %722 : vector<2x4x15xf32>
    %c62_279 = arith.constant 62 : index
    %724 = memref.load %arg5[%c62_279] : memref<64xf32, #tpu.memory_space<smem>>
    %725 = vector.broadcast %724 : f32 to vector<2x4x15xf32>
    %726 = arith.mulf %725, %398 : vector<2x4x15xf32>
    %727 = arith.addf %723, %726 : vector<2x4x15xf32>
    %c0_280 = arith.constant 0 : index
    %c3_281 = arith.constant 3 : index
    %c1_282 = arith.constant 1 : index
    %c0_283 = arith.constant 0 : index
    %728 = vector.load %arg7[%c0_280, %c3_281, %c1_282, %c0_283] : memref<2x4x5x16xf32, #tpu.memory_space<vmem>>, vector<2x1x4x15xf32>
    %729 = vector.shape_cast %728 : vector<2x1x4x15xf32> to vector<2x4x15xf32>
    %730 = arith.addf %729, %727 : vector<2x4x15xf32>
    %c0_284 = arith.constant 0 : index
    %c3_285 = arith.constant 3 : index
    %c1_286 = arith.constant 1 : index
    %c0_287 = arith.constant 0 : index
    %731 = vector.load %arg7[%c0_284, %c3_285, %c1_286, %c0_287] : memref<2x4x5x16xf32, #tpu.memory_space<vmem>>, vector<2x1x4x15xf32>
    %732 = vector.shape_cast %731 : vector<2x1x4x15xf32> to vector<2x4x15xf32>
    %733 = vector.shape_cast %730 : vector<2x4x15xf32> to vector<2x1x4x15xf32>
    tpu.vector_store %arg7[%c0_284, %c3_285, %c1_286, %c0_287], %733 {strides = array<i32>} : memref<2x4x5x16xf32, #tpu.memory_space<vmem>>, vector<2x1x4x15xf32>,
    %c15_288 = arith.constant 15 : index
    %734 = memref.load %arg5[%c15_288] : memref<64xf32, #tpu.memory_space<smem>>
    %735 = vector.broadcast %734 : f32 to vector<2x4x15xf32>
    %736 = arith.mulf %735, %383 : vector<2x4x15xf32>
    %c31_289 = arith.constant 31 : index
    %737 = memref.load %arg5[%c31_289] : memref<64xf32, #tpu.memory_space<smem>>
    %738 = vector.broadcast %737 : f32 to vector<2x4x15xf32>
    %739 = arith.mulf %738, %388 : vector<2x4x15xf32>
    %740 = arith.addf %736, %739 : vector<2x4x15xf32>
    %c47_290 = arith.constant 47 : index
    %741 = memref.load %arg5[%c47_290] : memref<64xf32, #tpu.memory_space<smem>>
    %742 = vector.broadcast %741 : f32 to vector<2x4x15xf32>
    %743 = arith.mulf %742, %393 : vector<2x4x15xf32>
    %744 = arith.addf %740, %743 : vector<2x4x15xf32>
    %c63_291 = arith.constant 63 : index
    %745 = memref.load %arg5[%c63_291] : memref<64xf32, #tpu.memory_space<smem>>
    %746 = vector.broadcast %745 : f32 to vector<2x4x15xf32>
    %747 = arith.mulf %746, %398 : vector<2x4x15xf32>
    %748 = arith.addf %744, %747 : vector<2x4x15xf32>
    %c0_292 = arith.constant 0 : index
    %c3_293 = arith.constant 3 : index
    %c1_294 = arith.constant 1 : index
    %c1_295 = arith.constant 1 : index
    %749 = vector.load %arg7[%c0_292, %c3_293, %c1_294, %c1_295] : memref<2x4x5x16xf32, #tpu.memory_space<vmem>>, vector<2x1x4x15xf32>
    %750 = vector.shape_cast %749 : vector<2x1x4x15xf32> to vector<2x4x15xf32>
    %751 = arith.addf %750, %748 : vector<2x4x15xf32>
    %c0_296 = arith.constant 0 : index
    %c3_297 = arith.constant 3 : index
    %c1_298 = arith.constant 1 : index
    %c1_299 = arith.constant 1 : index
    %752 = vector.load %arg7[%c0_296, %c3_297, %c1_298, %c1_299] : memref<2x4x5x16xf32, #tpu.memory_space<vmem>>, vector<2x1x4x15xf32>
    %753 = vector.shape_cast %752 : vector<2x1x4x15xf32> to vector<2x4x15xf32>
    %754 = vector.shape_cast %751 : vector<2x4x15xf32> to vector<2x1x4x15xf32>
    tpu.vector_store %arg7[%c0_296, %c3_297, %c1_298, %c1_299], %754 {strides = array<i32>} : memref<2x4x5x16xf32, #tpu.memory_space<vmem>>, vector<2x1x4x15xf32>,
    return
  }
}

</mosaic_0001>

<llo_original>
// kernel: model_forward.1
$region0: #{model_forward.1}
  #allocation0 [shape = 'u32[]', space=smem, size = 0x4, offset = 0x4, fixed_abs, tag = 'smem constant byte address 0x4 - core index']
  #allocation1 [shape = 'u32[72,128]{1,0:T(1,128)}', space=vmem, size = 0x9000, scoped, tag = 'internal scratch']
  #allocation2 [shape = 'f32[1]{0:T(128)S(6)}', space=smem, size = 0x200, scoped, tag = 'scoped memory for model_forward.1']
  %s0 = inlined_call_operand.vmem [shape: f32[2,4,5,16], index: 0, kind: input, shape index: {}]
  %s1 = inlined_call_operand.vmem [shape: f32[64], index: 1, kind: input, shape index: {}]
  %s2 = inlined_call_operand.vmem [shape: f32[4], index: 2, kind: input, shape index: {}]
  %s3 = inlined_call_operand.vmem [shape: f32[16], index: 3, kind: input, shape index: {}]
  %s4 = inlined_call_operand.<no memory space> [shape: f32[1], index: 4, kind: input, shape index: {}]
  %s5 = inlined_call_operand.vmem [shape: f32[64], index: 5, kind: input, shape index: {}]
  %s6 = inlined_call_operand.vmem [shape: f32[4], index: 6, kind: input, shape index: {}]
  %s7 = inlined_call_operand.vmem [shape: f32[2,4,5,16], index: 7, kind: output, shape index: {0}]
  %s8 = inlined_call_operand.vmem [shape: f32[2,3,14], index: 8, kind: output, shape index: {1}]
  %9 = xla_tuple %s7, %s8
  %s10 = sld [smem:[#allocation0]]
  $region66: #{model_forward.1} parent=0
    _
  %s12 = ssub.s32 1, %s10
  %s13 = scalar_select 0, %s12, %s10
  %14 = sst [smem:[#allocation2]] %s4
  $region1: #{model_forward.1} parent=0
    #allocation3 [shape = 'u8[512]{0}', space=smem, size = 0x200, scoped, tag = 'input window, operand 1, single buffered']
    #allocation4 [shape = 's32[1]{0}', space=sflag, size = 0x4, scoped, tag = 'scoped memory for model_forward.1']
    #allocation5 [shape = 'u8[512]{0}', space=smem, size = 0x200, scoped, tag = 'input window, operand 2, single buffered']
    #allocation6 [shape = 's32[1]{0}', space=sflag, size = 0x4, scoped, tag = 'scoped memory for model_forward.1']
    #allocation7 [shape = 'u8[512]{0}', space=smem, size = 0x200, scoped, tag = 'input window, operand 3, single buffered']
    #allocation8 [shape = 'u8[512]{0}', space=smem, size = 0x200, scoped, tag = 'input window, operand 5, single buffered']
    #allocation9 [shape = 's32[1]{0}', space=sflag, size = 0x4, scoped, tag = 'scoped memory for model_forward.1']
    #allocation10 [shape = 'u8[512]{0}', space=smem, size = 0x200, scoped, tag = 'input window, operand 6, single buffered']
    %15 = vsyncpa [#allocation4], 0
    %16 = vsyncpa [#allocation6], 0
    %17 = vsyncpa [#allocation9], 0
    // Predicated region
    $region2: #{model_forward.1} parent=1 // pred_check
      _
    $region3: #{model_forward.1} parent=1 // pred_check_branch
      %19 = sbr.rel (0) target = $region5
    $region4: #{model_forward.1} parent=1 // pred_region
      _
    $region5: #{model_forward.1} parent=1 // pred_fallthru
      _
    // Predicated region
    $region6: #{model_forward.1} parent=1 // pred_check
      _
    $region7: #{model_forward.1} parent=1 // pred_check_branch
      %21 = sbr.rel (0) target = $region9
    $region8: #{model_forward.1} parent=1 // pred_region
      %23 = vsyncadd [#allocation4], 0
      %s25 = sshll.u32 %s1, 4
      %s26 = int_to_ptr.vmem [resolvable:$true] %s25
      %28 = dma.vmem_to_smem %s26, 16, [#allocation3], [#allocation4]
    $region9: #{model_forward.1} parent=1 // pred_fallthru
      _
    // Predicated region
    $region10: #{model_forward.1} parent=1 // pred_check
      _
    $region11: #{model_forward.1} parent=1 // pred_check_branch
      %30 = sbr.rel (0) target = $region13
    $region12: #{model_forward.1} parent=1 // pred_region
      %32 = vsyncadd [#allocation6], 0
      %s34 = sshll.u32 %s2, 4
      %s35 = int_to_ptr.vmem [resolvable:$true] %s34
      %37 = dma.vmem_to_smem %s35, 16, [#allocation5], [#allocation6]
    $region13: #{model_forward.1} parent=1 // pred_fallthru
      _
    // Predicated region
    $region14: #{model_forward.1} parent=1 // pred_check
      _
    $region15: #{model_forward.1} parent=1 // pred_check_branch
      %39 = sbr.rel (0) target = $region17
    $region16: #{model_forward.1} parent=1 // pred_region
      %41 = vsyncadd [#allocation6], 0
      %s43 = sshll.u32 %s3, 4
      %s44 = int_to_ptr.vmem [resolvable:$true] %s43
      %46 = dma.vmem_to_smem %s44, 16, [#allocation7], [#allocation6]
    $region17: #{model_forward.1} parent=1 // pred_fallthru
      _
    // Predicated region
    $region18: #{model_forward.1} parent=1 // pred_check
      _
    $region19: #{model_forward.1} parent=1 // pred_check_branch
      %48 = sbr.rel (0) target = $region21
    $region20: #{model_forward.1} parent=1 // pred_region
      _
    $region21: #{model_forward.1} parent=1 // pred_fallthru
      _
    // Predicated region
    $region22: #{model_forward.1} parent=1 // pred_check
      _
    $region23: #{model_forward.1} parent=1 // pred_check_branch
      %50 = sbr.rel (0) target = $region25
    $region24: #{model_forward.1} parent=1 // pred_region
      %52 = vsyncadd [#allocation9], 0
      %s54 = sshll.u32 %s5, 4
      %s55 = int_to_ptr.vmem [resolvable:$true] %s54
      %57 = dma.vmem_to_smem %s55, 16, [#allocation8], [#allocation9]
    $region25: #{model_forward.1} parent=1 // pred_fallthru
      _
    // Predicated region
    $region26: #{model_forward.1} parent=1 // pred_check
      _
    $region27: #{model_forward.1} parent=1 // pred_check_branch
      %59 = sbr.rel (0) target = $region29
    $region28: #{model_forward.1} parent=1 // pred_region
      %61 = vsyncadd [#allocation9], 0
      %s63 = sshll.u32 %s6, 4
      %s64 = int_to_ptr.vmem [resolvable:$true] %s63
      %66 = dma.vmem_to_smem %s64, 16, [#allocation10], [#allocation9]
    $region29: #{model_forward.1} parent=1 // pred_fallthru
      _
    // Predicated region
    $region30: #{model_forward.1} parent=1 // pred_check
      _
    $region31: #{model_forward.1} parent=1 // pred_check_branch
      %68 = sbr.rel (0) target = $region33
    $region32: #{model_forward.1} parent=1 // pred_region
      %70 = dma.done [#allocation4], 16
    $region33: #{model_forward.1} parent=1 // pred_fallthru
      _
    // Predicated region
    $region34: #{model_forward.1} parent=1 // pred_check
      _
    $region35: #{model_forward.1} parent=1 // pred_check_branch
      %72 = sbr.rel (0) target = $region37
    $region36: #{model_forward.1} parent=1 // pred_region
      %74 = dma.done [#allocation6], 16
    $region37: #{model_forward.1} parent=1 // pred_fallthru
      _
    // Predicated region
    $region38: #{model_forward.1} parent=1 // pred_check
      _
    $region39: #{model_forward.1} parent=1 // pred_check_branch
      %76 = sbr.rel (0) target = $region41
    $region40: #{model_forward.1} parent=1 // pred_region
      %78 = dma.done [#allocation6], 16
    $region41: #{model_forward.1} parent=1 // pred_fallthru
      _
    // Predicated region
    $region42: #{model_forward.1} parent=1 // pred_check
      _
    $region43: #{model_forward.1} parent=1 // pred_check_branch
      %80 = sbr.rel (0) target = $region45
    $region44: #{model_forward.1} parent=1 // pred_region
      %82 = dma.done [#allocation9], 16
    $region45: #{model_forward.1} parent=1 // pred_fallthru
      _
    // Predicated region
    $region46: #{model_forward.1} parent=1 // pred_check
      _
    $region47: #{model_forward.1} parent=1 // pred_check_branch
      %84 = sbr.rel (0) target = $region49
    $region48: #{model_forward.1} parent=1 // pred_region
      %86 = dma.done [#allocation9], 16
    $region49: #{model_forward.1} parent=1 // pred_fallthru
      _
    %87 = sfence
    %v88 = vld [vmem:[%s0] sm:$0xf]
    %v89 = vld [vmem:[%s0 + $0x20] sm:$0xf]
    %v90 = vld [vmem:[%s0 + $0x1] sm:$0xf]
    %v91 = vld [vmem:[%s0 + $0x21] sm:$0xf]
    %s92 = scalar_lea.vmem %s0, 8
    %v93 = vld [vmem:[%s92] sm:$0xf]
    %v94 = vld [vmem:[%s92 + $0x20] sm:$0xf]
    %v95 = vld [vmem:[%s92 + $0x1] sm:$0xf]
    %v96 = vld [vmem:[%s92 + $0x21] sm:$0xf]
    %s97 = scalar_lea.vmem %s0, 16
    %v98 = vld [vmem:[%s97] sm:$0xf]
    %v99 = vld [vmem:[%s97 + $0x20] sm:$0xf]
    %v100 = vld [vmem:[%s97 + $0x1] sm:$0xf]
    %v101 = vld [vmem:[%s97 + $0x21] sm:$0xf]
    %s102 = scalar_lea.vmem %s0, 24
    %v103 = vld [vmem:[%s102] sm:$0xf]
    %v104 = vld [vmem:[%s102 + $0x20] sm:$0xf]
    %v105 = vld [vmem:[%s102 + $0x1] sm:$0xf]
    %v106 = vld [vmem:[%s102 + $0x21] sm:$0xf]
    %s107 = sld [smem:[#allocation3]]
    %v108 = vstv %s107
    %v109 = vmul.f32 %v108, %v88
    %v110 = vmul.f32 %v108, %v89
    %s111 = sld [smem:[#allocation3 + $0x1]]
    %v112 = vstv %s111
    %v113 = vmul.f32 %v112, %v88
    %v114 = vmul.f32 %v112, %v89
    %117 = vrot.lane.b32.xlu0 %v113, 127
    %v118 = vpop.permute.xlu0 %117
    %119 = vrot.lane.b32.xlu0 %v114, 127
    %v120 = vpop.permute.xlu0 %119
    %v123 = vadd.f32 %v109, %v118
    %v124 = vadd.f32 %v110, %v120
    %s125 = sld [smem:[#allocation3 + $0x2]]
    %v126 = vstv %s125
    %v127 = vmul.f32 %v126, %v90
    %v128 = vmul.f32 %v126, %v91
    %v129 = vadd.f32 %v123, %v127
    %v130 = vadd.f32 %v124, %v128
    %s131 = sld [smem:[#allocation3 + $0x3]]
    %v132 = vstv %s131
    %v133 = vmul.f32 %v132, %v90
    %v134 = vmul.f32 %v132, %v91
    %137 = vrot.lane.b32.xlu0 %v133, 127
    %v138 = vpop.permute.xlu0 %137
    %139 = vrot.lane.b32.xlu0 %v134, 127
    %v140 = vpop.permute.xlu0 %139
    %v143 = vadd.f32 %v129, %v138
    %v144 = vadd.f32 %v130, %v140
    %s145 = sld [smem:[#allocation3 + $0x4]]
    %v146 = vstv %s145
    %v147 = vmul.f32 %v146, %v93
    %v148 = vmul.f32 %v146, %v94
    %v149 = vadd.f32 %v143, %v147
    %v150 = vadd.f32 %v144, %v148
    %s151 = sld [smem:[#allocation3 + $0x5]]
    %v152 = vstv %s151
    %v153 = vmul.f32 %v152, %v93
    %v154 = vmul.f32 %v152, %v94
    %157 = vrot.lane.b32.xlu0 %v153, 127
    %v158 = vpop.permute.xlu0 %157
    %159 = vrot.lane.b32.xlu0 %v154, 127
    %v160 = vpop.permute.xlu0 %159
    %v163 = vadd.f32 %v149, %v158
    %v164 = vadd.f32 %v150, %v160
    %s165 = sld [smem:[#allocation3 + $0x6]]
    %v166 = vstv %s165
    %v167 = vmul.f32 %v166, %v95
    %v168 = vmul.f32 %v166, %v96
    %v169 = vadd.f32 %v163, %v167
    %v170 = vadd.f32 %v164, %v168
    %s171 = sld [smem:[#allocation3 + $0x7]]
    %v172 = vstv %s171
    %v173 = vmul.f32 %v172, %v95
    %v174 = vmul.f32 %v172, %v96
    %177 = vrot.lane.b32.xlu0 %v173, 127
    %v178 = vpop.permute.xlu0 %177
    %179 = vrot.lane.b32.xlu0 %v174, 127
    %v180 = vpop.permute.xlu0 %179
    %v183 = vadd.f32 %v169, %v178
    %v184 = vadd.f32 %v170, %v180
    %s185 = sld [smem:[#allocation3 + $0x8]]
    %v186 = vstv %s185
    %v187 = vmul.f32 %v186, %v98
    %v188 = vmul.f32 %v186, %v99
    %v189 = vadd.f32 %v183, %v187
    %v190 = vadd.f32 %v184, %v188
    %s191 = sld [smem:[#allocation3 + $0x9]]
    %v192 = vstv %s191
    %v193 = vmul.f32 %v192, %v98
    %v194 = vmul.f32 %v192, %v99
    %197 = vrot.lane.b32.xlu0 %v193, 127
    %v198 = vpop.permute.xlu0 %197
    %199 = vrot.lane.b32.xlu0 %v194, 127
    %v200 = vpop.permute.xlu0 %199
    %v203 = vadd.f32 %v189, %v198
    %v204 = vadd.f32 %v190, %v200
    %s205 = sld [smem:[#allocation3 + $0xa]]
    %v206 = vstv %s205
    %v207 = vmul.f32 %v206, %v100
    %v208 = vmul.f32 %v206, %v101
    %v209 = vadd.f32 %v203, %v207
    %v210 = vadd.f32 %v204, %v208
    %s211 = sld [smem:[#allocation3 + $0xb]]
    %v212 = vstv %s211
    %v213 = vmul.f32 %v212, %v100
    %v214 = vmul.f32 %v212, %v101
    %217 = vrot.lane.b32.xlu0 %v213, 127
    %v218 = vpop.permute.xlu0 %217
    %219 = vrot.lane.b32.xlu0 %v214, 127
    %v220 = vpop.permute.xlu0 %219
    %v223 = vadd.f32 %v209, %v218
    %v224 = vadd.f32 %v210, %v220
    %s225 = sld [smem:[#allocation3 + $0xc]]
    %v226 = vstv %s225
    %v227 = vmul.f32 %v226, %v103
    %v228 = vmul.f32 %v226, %v104
    %v229 = vadd.f32 %v223, %v227
    %v230 = vadd.f32 %v224, %v228
    %s231 = sld [smem:[#allocation3 + $0xd]]
    %v232 = vstv %s231
    %v233 = vmul.f32 %v232, %v103
    %v234 = vmul.f32 %v232, %v104
    %237 = vrot.lane.b32.xlu0 %v233, 127
    %v238 = vpop.permute.xlu0 %237
    %239 = vrot.lane.b32.xlu0 %v234, 127
    %v240 = vpop.permute.xlu0 %239
    %v243 = vadd.f32 %v229, %v238
    %v244 = vadd.f32 %v230, %v240
    %s245 = sld [smem:[#allocation3 + $0xe]]
    %v246 = vstv %s245
    %v247 = vmul.f32 %v246, %v105
    %v248 = vmul.f32 %v246, %v106
    %v249 = vadd.f32 %v243, %v247
    %v250 = vadd.f32 %v244, %v248
    %s251 = sld [smem:[#allocation3 + $0xf]]
    %v252 = vstv %s251
    %v253 = vmul.f32 %v252, %v105
    %v254 = vmul.f32 %v252, %v106
    %257 = vrot.lane.b32.xlu0 %v253, 127
    %v258 = vpop.permute.xlu0 %257
    %259 = vrot.lane.b32.xlu0 %v254, 127
    %v260 = vpop.permute.xlu0 %259
    %v263 = vadd.f32 %v249, %v258
    %v264 = vadd.f32 %v250, %v260
    %s265 = sld [smem:[#allocation5]]
    %v266 = vstv %s265
    %v267 = vadd.f32 %v263, %v266
    %v268 = vadd.f32 %v264, %v266
    %s269 = sld [smem:[#allocation3 + $0x10]]
    %v270 = vstv %s269
    %v271 = vmul.f32 %v270, %v88
    %v272 = vmul.f32 %v270, %v89
    %s273 = sld [smem:[#allocation3 + $0x11]]
    %v274 = vstv %s273
    %v275 = vmul.f32 %v274, %v88
    %v276 = vmul.f32 %v274, %v89
    %279 = vrot.lane.b32.xlu0 %v275, 127
    %v280 = vpop.permute.xlu0 %279
    %281 = vrot.lane.b32.xlu0 %v276, 127
    %v282 = vpop.permute.xlu0 %281
    %v285 = vadd.f32 %v271, %v280
    %v286 = vadd.f32 %v272, %v282
    %s287 = sld [smem:[#allocation3 + $0x12]]
    %v288 = vstv %s287
    %v289 = vmul.f32 %v288, %v90
    %v290 = vmul.f32 %v288, %v91
    %v291 = vadd.f32 %v285, %v289
    %v292 = vadd.f32 %v286, %v290
    %s293 = sld [smem:[#allocation3 + $0x13]]
    %v294 = vstv %s293
    %v295 = vmul.f32 %v294, %v90
    %v296 = vmul.f32 %v294, %v91
    %299 = vrot.lane.b32.xlu0 %v295, 127
    %v300 = vpop.permute.xlu0 %299
    %301 = vrot.lane.b32.xlu0 %v296, 127
    %v302 = vpop.permute.xlu0 %301
    %v305 = vadd.f32 %v291, %v300
    %v306 = vadd.f32 %v292, %v302
    %s307 = sld [smem:[#allocation3 + $0x14]]
    %v308 = vstv %s307
    %v309 = vmul.f32 %v308, %v93
    %v310 = vmul.f32 %v308, %v94
    %v311 = vadd.f32 %v305, %v309
    %v312 = vadd.f32 %v306, %v310
    %s313 = sld [smem:[#allocation3 + $0x15]]
    %v314 = vstv %s313
    %v315 = vmul.f32 %v314, %v93
    %v316 = vmul.f32 %v314, %v94
    %319 = vrot.lane.b32.xlu0 %v315, 127
    %v320 = vpop.permute.xlu0 %319
    %321 = vrot.lane.b32.xlu0 %v316, 127
    %v322 = vpop.permute.xlu0 %321
    %v325 = vadd.f32 %v311, %v320
    %v326 = vadd.f32 %v312, %v322
    %s327 = sld [smem:[#allocation3 + $0x16]]
    %v328 = vstv %s327
    %v329 = vmul.f32 %v328, %v95
    %v330 = vmul.f32 %v328, %v96
    %v331 = vadd.f32 %v325, %v329
    %v332 = vadd.f32 %v326, %v330
    %s333 = sld [smem:[#allocation3 + $0x17]]
    %v334 = vstv %s333
    %v335 = vmul.f32 %v334, %v95
    %v336 = vmul.f32 %v334, %v96
    %339 = vrot.lane.b32.xlu0 %v335, 127
    %v340 = vpop.permute.xlu0 %339
    %341 = vrot.lane.b32.xlu0 %v336, 127
    %v342 = vpop.permute.xlu0 %341
    %v345 = vadd.f32 %v331, %v340
    %v346 = vadd.f32 %v332, %v342
    %s347 = sld [smem:[#allocation3 + $0x18]]
    %v348 = vstv %s347
    %v349 = vmul.f32 %v348, %v98
    %v350 = vmul.f32 %v348, %v99
    %v351 = vadd.f32 %v345, %v349
    %v352 = vadd.f32 %v346, %v350
    %s353 = sld [smem:[#allocation3 + $0x19]]
    %v354 = vstv %s353
    %v355 = vmul.f32 %v354, %v98
    %v356 = vmul.f32 %v354, %v99
    %359 = vrot.lane.b32.xlu0 %v355, 127
    %v360 = vpop.permute.xlu0 %359
    %361 = vrot.lane.b32.xlu0 %v356, 127
    %v362 = vpop.permute.xlu0 %361
    %v365 = vadd.f32 %v351, %v360
    %v366 = vadd.f32 %v352, %v362
    %s367 = sld [smem:[#allocation3 + $0x1a]]
    %v368 = vstv %s367
    %v369 = vmul.f32 %v368, %v100
    %v370 = vmul.f32 %v368, %v101
    %v371 = vadd.f32 %v365, %v369
    %v372 = vadd.f32 %v366, %v370
    %s373 = sld [smem:[#allocation3 + $0x1b]]
    %v374 = vstv %s373
    %v375 = vmul.f32 %v374, %v100
    %v376 = vmul.f32 %v374, %v101
    %379 = vrot.lane.b32.xlu0 %v375, 127
    %v380 = vpop.permute.xlu0 %379
    %381 = vrot.lane.b32.xlu0 %v376, 127
    %v382 = vpop.permute.xlu0 %381
    %v385 = vadd.f32 %v371, %v380
    %v386 = vadd.f32 %v372, %v382
    %s387 = sld [smem:[#allocation3 + $0x1c]]
    %v388 = vstv %s387
    %v389 = vmul.f32 %v388, %v103
    %v390 = vmul.f32 %v388, %v104
    %v391 = vadd.f32 %v385, %v389
    %v392 = vadd.f32 %v386, %v390
    %s393 = sld [smem:[#allocation3 + $0x1d]]
    %v394 = vstv %s393
    %v395 = vmul.f32 %v394, %v103
    %v396 = vmul.f32 %v394, %v104
    %399 = vrot.lane.b32.xlu0 %v395, 127
    %v400 = vpop.permute.xlu0 %399
    %401 = vrot.lane.b32.xlu0 %v396, 127
    %v402 = vpop.permute.xlu0 %401
    %v405 = vadd.f32 %v391, %v400
    %v406 = vadd.f32 %v392, %v402
    %s407 = sld [smem:[#allocation3 + $0x1e]]
    %v408 = vstv %s407
    %v409 = vmul.f32 %v408, %v105
    %v410 = vmul.f32 %v408, %v106
    %v411 = vadd.f32 %v405, %v409
    %v412 = vadd.f32 %v406, %v410
    %s413 = sld [smem:[#allocation3 + $0x1f]]
    %v414 = vstv %s413
    %v415 = vmul.f32 %v414, %v105
    %v416 = vmul.f32 %v414, %v106
    %419 = vrot.lane.b32.xlu0 %v415, 127
    %v420 = vpop.permute.xlu0 %419
    %421 = vrot.lane.b32.xlu0 %v416, 127
    %v422 = vpop.permute.xlu0 %421
    %v425 = vadd.f32 %v411, %v420
    %v426 = vadd.f32 %v412, %v422
    %s427 = sld [smem:[#allocation5 + $0x1]]
    %v428 = vstv %s427
    %v429 = vadd.f32 %v425, %v428
    %v430 = vadd.f32 %v426, %v428
    %s431 = sld [smem:[#allocation3 + $0x20]]
    %v432 = vstv %s431
    %v433 = vmul.f32 %v432, %v88
    %v434 = vmul.f32 %v432, %v89
    %s435 = sld [smem:[#allocation3 + $0x21]]
    %v436 = vstv %s435
    %v437 = vmul.f32 %v436, %v88
    %v438 = vmul.f32 %v436, %v89
    %441 = vrot.lane.b32.xlu0 %v437, 127
    %v442 = vpop.permute.xlu0 %441
    %443 = vrot.lane.b32.xlu0 %v438, 127
    %v444 = vpop.permute.xlu0 %443
    %v447 = vadd.f32 %v433, %v442
    %v448 = vadd.f32 %v434, %v444
    %s449 = sld [smem:[#allocation3 + $0x22]]
    %v450 = vstv %s449
    %v451 = vmul.f32 %v450, %v90
    %v452 = vmul.f32 %v450, %v91
    %v453 = vadd.f32 %v447, %v451
    %v454 = vadd.f32 %v448, %v452
    %s455 = sld [smem:[#allocation3 + $0x23]]
    %v456 = vstv %s455
    %v457 = vmul.f32 %v456, %v90
    %v458 = vmul.f32 %v456, %v91
    %461 = vrot.lane.b32.xlu0 %v457, 127
    %v462 = vpop.permute.xlu0 %461
    %463 = vrot.lane.b32.xlu0 %v458, 127
    %v464 = vpop.permute.xlu0 %463
    %v467 = vadd.f32 %v453, %v462
    %v468 = vadd.f32 %v454, %v464
    %s469 = sld [smem:[#allocation3 + $0x24]]
    %v470 = vstv %s469
    %v471 = vmul.f32 %v470, %v93
    %v472 = vmul.f32 %v470, %v94
    %v473 = vadd.f32 %v467, %v471
    %v474 = vadd.f32 %v468, %v472
    %s475 = sld [smem:[#allocation3 + $0x25]]
    %v476 = vstv %s475
    %v477 = vmul.f32 %v476, %v93
    %v478 = vmul.f32 %v476, %v94
    %481 = vrot.lane.b32.xlu0 %v477, 127
    %v482 = vpop.permute.xlu0 %481
    %483 = vrot.lane.b32.xlu0 %v478, 127
    %v484 = vpop.permute.xlu0 %483
    %v487 = vadd.f32 %v473, %v482
    %v488 = vadd.f32 %v474, %v484
    %s489 = sld [smem:[#allocation3 + $0x26]]
    %v490 = vstv %s489
    %v491 = vmul.f32 %v490, %v95
    %v492 = vmul.f32 %v490, %v96
    %v493 = vadd.f32 %v487, %v491
    %v494 = vadd.f32 %v488, %v492
    %s495 = sld [smem:[#allocation3 + $0x27]]
    %v496 = vstv %s495
    %v497 = vmul.f32 %v496, %v95
    %v498 = vmul.f32 %v496, %v96
    %501 = vrot.lane.b32.xlu0 %v497, 127
    %v502 = vpop.permute.xlu0 %501
    %503 = vrot.lane.b32.xlu0 %v498, 127
    %v504 = vpop.permute.xlu0 %503
    %v507 = vadd.f32 %v493, %v502
    %v508 = vadd.f32 %v494, %v504
    %s509 = sld [smem:[#allocation3 + $0x28]]
    %v510 = vstv %s509
    %v511 = vmul.f32 %v510, %v98
    %v512 = vmul.f32 %v510, %v99
    %v513 = vadd.f32 %v507, %v511
    %v514 = vadd.f32 %v508, %v512
    %s515 = sld [smem:[#allocation3 + $0x29]]
    %v516 = vstv %s515
    %v517 = vmul.f32 %v516, %v98
    %v518 = vmul.f32 %v516, %v99
    %521 = vrot.lane.b32.xlu0 %v517, 127
    %v522 = vpop.permute.xlu0 %521
    %523 = vrot.lane.b32.xlu0 %v518, 127
    %v524 = vpop.permute.xlu0 %523
    %v527 = vadd.f32 %v513, %v522
    %v528 = vadd.f32 %v514, %v524
    %s529 = sld [smem:[#allocation3 + $0x2a]]
    %v530 = vstv %s529
    %v531 = vmul.f32 %v530, %v100
    %v532 = vmul.f32 %v530, %v101
    %v533 = vadd.f32 %v527, %v531
    %v534 = vadd.f32 %v528, %v532
    %s535 = sld [smem:[#allocation3 + $0x2b]]
    %v536 = vstv %s535
    %v537 = vmul.f32 %v536, %v100
    %v538 = vmul.f32 %v536, %v101
    %541 = vrot.lane.b32.xlu0 %v537, 127
    %v542 = vpop.permute.xlu0 %541
    %543 = vrot.lane.b32.xlu0 %v538, 127
    %v544 = vpop.permute.xlu0 %543
    %v547 = vadd.f32 %v533, %v542
    %v548 = vadd.f32 %v534, %v544
    %s549 = sld [smem:[#allocation3 + $0x2c]]
    %v550 = vstv %s549
    %v551 = vmul.f32 %v550, %v103
    %v552 = vmul.f32 %v550, %v104
    %v553 = vadd.f32 %v547, %v551
    %v554 = vadd.f32 %v548, %v552
    %s555 = sld [smem:[#allocation3 + $0x2d]]
    %v556 = vstv %s555
    %v557 = vmul.f32 %v556, %v103
    %v558 = vmul.f32 %v556, %v104
    %561 = vrot.lane.b32.xlu0 %v557, 127
    %v562 = vpop.permute.xlu0 %561
    %563 = vrot.lane.b32.xlu0 %v558, 127
    %v564 = vpop.permute.xlu0 %563
    %v567 = vadd.f32 %v553, %v562
    %v568 = vadd.f32 %v554, %v564
    %s569 = sld [smem:[#allocation3 + $0x2e]]
    %v570 = vstv %s569
    %v571 = vmul.f32 %v570, %v105
    %v572 = vmul.f32 %v570, %v106
    %v573 = vadd.f32 %v567, %v571
    %v574 = vadd.f32 %v568, %v572
    %s575 = sld [smem:[#allocation3 + $0x2f]]
    %v576 = vstv %s575
    %v577 = vmul.f32 %v576, %v105
    %v578 = vmul.f32 %v576, %v106
    %581 = vrot.lane.b32.xlu0 %v577, 127
    %v582 = vpop.permute.xlu0 %581
    %583 = vrot.lane.b32.xlu0 %v578, 127
    %v584 = vpop.permute.xlu0 %583
    %v587 = vadd.f32 %v573, %v582
    %v588 = vadd.f32 %v574, %v584
    %s589 = sld [smem:[#allocation5 + $0x2]]
    %v590 = vstv %s589
    %v591 = vadd.f32 %v587, %v590
    %v592 = vadd.f32 %v588, %v590
    %s593 = sld [smem:[#allocation3 + $0x30]]
    %v594 = vstv %s593
    %v595 = vmul.f32 %v594, %v88
    %v596 = vmul.f32 %v594, %v89
    %s597 = sld [smem:[#allocation3 + $0x31]]
    %v598 = vstv %s597
    %v599 = vmul.f32 %v598, %v88
    %v600 = vmul.f32 %v598, %v89
    %603 = vrot.lane.b32.xlu0 %v599, 127
    %v604 = vpop.permute.xlu0 %603
    %605 = vrot.lane.b32.xlu0 %v600, 127
    %v606 = vpop.permute.xlu0 %605
    %v609 = vadd.f32 %v595, %v604
    %v610 = vadd.f32 %v596, %v606
    %s611 = sld [smem:[#allocation3 + $0x32]]
    %v612 = vstv %s611
    %v613 = vmul.f32 %v612, %v90
    %v614 = vmul.f32 %v612, %v91
    %v615 = vadd.f32 %v609, %v613
    %v616 = vadd.f32 %v610, %v614
    %s617 = sld [smem:[#allocation3 + $0x33]]
    %v618 = vstv %s617
    %v619 = vmul.f32 %v618, %v90
    %v620 = vmul.f32 %v618, %v91
    %623 = vrot.lane.b32.xlu0 %v619, 127
    %v624 = vpop.permute.xlu0 %623
    %625 = vrot.lane.b32.xlu0 %v620, 127
    %v626 = vpop.permute.xlu0 %625
    %v629 = vadd.f32 %v615, %v624
    %v630 = vadd.f32 %v616, %v626
    %s631 = sld [smem:[#allocation3 + $0x34]]
    %v632 = vstv %s631
    %v633 = vmul.f32 %v632, %v93
    %v634 = vmul.f32 %v632, %v94
    %v635 = vadd.f32 %v629, %v633
    %v636 = vadd.f32 %v630, %v634
    %s637 = sld [smem:[#allocation3 + $0x35]]
    %v638 = vstv %s637
    %v639 = vmul.f32 %v638, %v93
    %v640 = vmul.f32 %v638, %v94
    %643 = vrot.lane.b32.xlu0 %v639, 127
    %v644 = vpop.permute.xlu0 %643
    %645 = vrot.lane.b32.xlu0 %v640, 127
    %v646 = vpop.permute.xlu0 %645
    %v649 = vadd.f32 %v635, %v644
    %v650 = vadd.f32 %v636, %v646
    %s651 = sld [smem:[#allocation3 + $0x36]]
    %v652 = vstv %s651
    %v653 = vmul.f32 %v652, %v95
    %v654 = vmul.f32 %v652, %v96
    %v655 = vadd.f32 %v649, %v653
    %v656 = vadd.f32 %v650, %v654
    %s657 = sld [smem:[#allocation3 + $0x37]]
    %v658 = vstv %s657
    %v659 = vmul.f32 %v658, %v95
    %v660 = vmul.f32 %v658, %v96
    %663 = vrot.lane.b32.xlu0 %v659, 127
    %v664 = vpop.permute.xlu0 %663
    %665 = vrot.lane.b32.xlu0 %v660, 127
    %v666 = vpop.permute.xlu0 %665
    %v669 = vadd.f32 %v655, %v664
    %v670 = vadd.f32 %v656, %v666
    %s671 = sld [smem:[#allocation3 + $0x38]]
    %v672 = vstv %s671
    %v673 = vmul.f32 %v672, %v98
    %v674 = vmul.f32 %v672, %v99
    %v675 = vadd.f32 %v669, %v673
    %v676 = vadd.f32 %v670, %v674
    %s677 = sld [smem:[#allocation3 + $0x39]]
    %v678 = vstv %s677
    %v679 = vmul.f32 %v678, %v98
    %v680 = vmul.f32 %v678, %v99
    %683 = vrot.lane.b32.xlu0 %v679, 127
    %v684 = vpop.permute.xlu0 %683
    %685 = vrot.lane.b32.xlu0 %v680, 127
    %v686 = vpop.permute.xlu0 %685
    %v689 = vadd.f32 %v675, %v684
    %v690 = vadd.f32 %v676, %v686
    %s691 = sld [smem:[#allocation3 + $0x3a]]
    %v692 = vstv %s691
    %v693 = vmul.f32 %v692, %v100
    %v694 = vmul.f32 %v692, %v101
    %v695 = vadd.f32 %v689, %v693
    %v696 = vadd.f32 %v690, %v694
    %s697 = sld [smem:[#allocation3 + $0x3b]]
    %v698 = vstv %s697
    %v699 = vmul.f32 %v698, %v100
    %v700 = vmul.f32 %v698, %v101
    %703 = vrot.lane.b32.xlu0 %v699, 127
    %v704 = vpop.permute.xlu0 %703
    %705 = vrot.lane.b32.xlu0 %v700, 127
    %v706 = vpop.permute.xlu0 %705
    %v709 = vadd.f32 %v695, %v704
    %v710 = vadd.f32 %v696, %v706
    %s711 = sld [smem:[#allocation3 + $0x3c]]
    %v712 = vstv %s711
    %v713 = vmul.f32 %v712, %v103
    %v714 = vmul.f32 %v712, %v104
    %v715 = vadd.f32 %v709, %v713
    %v716 = vadd.f32 %v710, %v714
    %s717 = sld [smem:[#allocation3 + $0x3d]]
    %v718 = vstv %s717
    %v719 = vmul.f32 %v718, %v103
    %v720 = vmul.f32 %v718, %v104
    %723 = vrot.lane.b32.xlu0 %v719, 127
    %v724 = vpop.permute.xlu0 %723
    %725 = vrot.lane.b32.xlu0 %v720, 127
    %v726 = vpop.permute.xlu0 %725
    %v729 = vadd.f32 %v715, %v724
    %v730 = vadd.f32 %v716, %v726
    %s731 = sld [smem:[#allocation3 + $0x3e]]
    %v732 = vstv %s731
    %v733 = vmul.f32 %v732, %v105
    %v734 = vmul.f32 %v732, %v106
    %v735 = vadd.f32 %v729, %v733
    %v736 = vadd.f32 %v730, %v734
    %s737 = sld [smem:[#allocation3 + $0x3f]]
    %v738 = vstv %s737
    %v739 = vmul.f32 %v738, %v105
    %v740 = vmul.f32 %v738, %v106
    %743 = vrot.lane.b32.xlu0 %v739, 127
    %v744 = vpop.permute.xlu0 %743
    %745 = vrot.lane.b32.xlu0 %v740, 127
    %v746 = vpop.permute.xlu0 %745
    %v749 = vadd.f32 %v735, %v744
    %v750 = vadd.f32 %v736, %v746
    %s751 = sld [smem:[#allocation5 + $0x3]]
    %v752 = vstv %s751
    %v753 = vadd.f32 %v749, %v752
    %v754 = vadd.f32 %v750, %v752
    %s755 = sld [smem:[#allocation7]]
    %v756 = vstv %s755
    %v757 = vmul.f32 %v756, %v267
    %v758 = vmul.f32 %v756, %v268
    %s759 = sld [smem:[#allocation7 + $0x1]]
    %v760 = vstv %s759
    %v761 = vmul.f32 %v760, %v267
    %v762 = vmul.f32 %v760, %v268
    %765 = vrot.lane.b32.xlu0 %v761, 127
    %v766 = vpop.permute.xlu0 %765
    %767 = vrot.lane.b32.xlu0 %v762, 127
    %v768 = vpop.permute.xlu0 %767
    %v771 = vadd.f32 %v757, %v766
    %v772 = vadd.f32 %v758, %v768
    %s773 = sld [smem:[#allocation7 + $0x2]]
    %v774 = vstv %s773
    %v775 = vmul.f32 %v774, %v267
    %v776 = vmul.f32 %v774, %v268
    %v779 = vrot.slane %v775, 1
    %v780 = vrot.slane %v776, 1
    %v783 = vadd.f32 %v771, %v779
    %v784 = vadd.f32 %v772, %v780
    %s785 = sld [smem:[#allocation7 + $0x3]]
    %v786 = vstv %s785
    %v787 = vmul.f32 %v786, %v267
    %v788 = vmul.f32 %v786, %v268
    %v791 = vrot.slane %v787, 1
    %v792 = vrot.slane %v788, 1
    %793 = vrot.lane.b32.xlu0 %v791, 127
    %v794 = vpop.permute.xlu0 %793
    %795 = vrot.lane.b32.xlu0 %v792, 127
    %v796 = vpop.permute.xlu0 %795
    %v799 = vadd.f32 %v783, %v794
    %v800 = vadd.f32 %v784, %v796
    %s801 = sld [smem:[#allocation7 + $0x4]]
    %v802 = vstv %s801
    %v803 = vmul.f32 %v802, %v429
    %v804 = vmul.f32 %v802, %v430
    %v805 = vadd.f32 %v799, %v803
    %v806 = vadd.f32 %v800, %v804
    %s807 = sld [smem:[#allocation7 + $0x5]]
    %v808 = vstv %s807
    %v809 = vmul.f32 %v808, %v429
    %v810 = vmul.f32 %v808, %v430
    %813 = vrot.lane.b32.xlu0 %v809, 127
    %v814 = vpop.permute.xlu0 %813
    %815 = vrot.lane.b32.xlu0 %v810, 127
    %v816 = vpop.permute.xlu0 %815
    %v819 = vadd.f32 %v805, %v814
    %v820 = vadd.f32 %v806, %v816
    %s821 = sld [smem:[#allocation7 + $0x6]]
    %v822 = vstv %s821
    %v823 = vmul.f32 %v822, %v429
    %v824 = vmul.f32 %v822, %v430
    %v827 = vrot.slane %v823, 1
    %v828 = vrot.slane %v824, 1
    %v831 = vadd.f32 %v819, %v827
    %v832 = vadd.f32 %v820, %v828
    %s833 = sld [smem:[#allocation7 + $0x7]]
    %v834 = vstv %s833
    %v835 = vmul.f32 %v834, %v429
    %v836 = vmul.f32 %v834, %v430
    %v839 = vrot.slane %v835, 1
    %v840 = vrot.slane %v836, 1
    %841 = vrot.lane.b32.xlu0 %v839, 127
    %v842 = vpop.permute.xlu0 %841
    %843 = vrot.lane.b32.xlu0 %v840, 127
    %v844 = vpop.permute.xlu0 %843
    %v847 = vadd.f32 %v831, %v842
    %v848 = vadd.f32 %v832, %v844
    %s849 = sld [smem:[#allocation7 + $0x8]]
    %v850 = vstv %s849
    %v851 = vmul.f32 %v850, %v591
    %v852 = vmul.f32 %v850, %v592
    %v853 = vadd.f32 %v847, %v851
    %v854 = vadd.f32 %v848, %v852
    %s855 = sld [smem:[#allocation7 + $0x9]]
    %v856 = vstv %s855
    %v857 = vmul.f32 %v856, %v591
    %v858 = vmul.f32 %v856, %v592
    %861 = vrot.lane.b32.xlu0 %v857, 127
    %v862 = vpop.permute.xlu0 %861
    %863 = vrot.lane.b32.xlu0 %v858, 127
    %v864 = vpop.permute.xlu0 %863
    %v867 = vadd.f32 %v853, %v862
    %v868 = vadd.f32 %v854, %v864
    %s869 = sld [smem:[#allocation7 + $0xa]]
    %v870 = vstv %s869
    %v871 = vmul.f32 %v870, %v591
    %v872 = vmul.f32 %v870, %v592
    %v875 = vrot.slane %v871, 1
    %v876 = vrot.slane %v872, 1
    %v879 = vadd.f32 %v867, %v875
    %v880 = vadd.f32 %v868, %v876
    %s881 = sld [smem:[#allocation7 + $0xb]]
    %v882 = vstv %s881
    %v883 = vmul.f32 %v882, %v591
    %v884 = vmul.f32 %v882, %v592
    %v887 = vrot.slane %v883, 1
    %v888 = vrot.slane %v884, 1
    %889 = vrot.lane.b32.xlu0 %v887, 127
    %v890 = vpop.permute.xlu0 %889
    %891 = vrot.lane.b32.xlu0 %v888, 127
    %v892 = vpop.permute.xlu0 %891
    %v895 = vadd.f32 %v879, %v890
    %v896 = vadd.f32 %v880, %v892
    %s897 = sld [smem:[#allocation7 + $0xc]]
    %v898 = vstv %s897
    %v899 = vmul.f32 %v898, %v753
    %v900 = vmul.f32 %v898, %v754
    %v901 = vadd.f32 %v895, %v899
    %v902 = vadd.f32 %v896, %v900
    %s903 = sld [smem:[#allocation7 + $0xd]]
    %v904 = vstv %s903
    %v905 = vmul.f32 %v904, %v753
    %v906 = vmul.f32 %v904, %v754
    %909 = vrot.lane.b32.xlu0 %v905, 127
    %v910 = vpop.permute.xlu0 %909
    %911 = vrot.lane.b32.xlu0 %v906, 127
    %v912 = vpop.permute.xlu0 %911
    %v915 = vadd.f32 %v901, %v910
    %v916 = vadd.f32 %v902, %v912
    %s917 = sld [smem:[#allocation7 + $0xe]]
    %v918 = vstv %s917
    %v919 = vmul.f32 %v918, %v753
    %v920 = vmul.f32 %v918, %v754
    %v923 = vrot.slane %v919, 1
    %v924 = vrot.slane %v920, 1
    %v927 = vadd.f32 %v915, %v923
    %v928 = vadd.f32 %v916, %v924
    %s929 = sld [smem:[#allocation7 + $0xf]]
    %v930 = vstv %s929
    %v931 = vmul.f32 %v930, %v753
    %v932 = vmul.f32 %v930, %v754
    %v935 = vrot.slane %v931, 1
    %v936 = vrot.slane %v932, 1
    %937 = vrot.lane.b32.xlu0 %v935, 127
    %v938 = vpop.permute.xlu0 %937
    %939 = vrot.lane.b32.xlu0 %v936, 127
    %v940 = vpop.permute.xlu0 %939
    %v943 = vadd.f32 %v927, %v938
    %v944 = vadd.f32 %v928, %v940
    %s945 = sld [smem:[#allocation2]]
    %v946 = vstv %s945
    %v947 = vadd.f32 %v943, %v946
    %v948 = vadd.f32 %v944, %v946
    %vm949 = vcmask 108544
    %950 = vst.msk [vmem:[%s8] sm:$0x7] %vm949, %v947
    %951 = vst.msk [vmem:[%s8 + $0x4] sm:$0x7] %vm949, %v948
    %v954 = vrot.slane %v429, 7
    %v955 = vrot.slane %v430, 7
    %v960 = vrot.slane %v591, 6
    %v961 = vrot.slane %v592, 6
    %v966 = vrot.slane %v753, 5
    %v967 = vrot.slane %v754, 5
    %vm970 = vcmask 1040384
    %v971 = vsel %vm970, %v267, %v954
    %v972 = vsel %vm970, %v268, %v955
    %vm973 = vcmask 1041408
    %v974 = vsel %vm973, %v971, %v960
    %v975 = vsel %vm973, %v972, %v961
    %vm976 = vcmask 1042432
    %v977 = vsel %vm976, %v974, %v966
    %v978 = vsel %vm976, %v975, %v967
    %v981 = vrot.slane %v267, 1
    %v982 = vrot.slane %v268, 1
    %v985 = vrot.slane %v591, 7
    %v986 = vrot.slane %v592, 7
    %v989 = vrot.slane %v753, 6
    %v990 = vrot.slane %v754, 6
    %v993 = vsel %vm970, %v981, %v429
    %v994 = vsel %vm970, %v982, %v430
    %v995 = vsel %vm973, %v993, %v985
    %v996 = vsel %vm973, %v994, %v986
    %v997 = vsel %vm976, %v995, %v989
    %v998 = vsel %vm976, %v996, %v990
    %v999 = vrot.slane %v267, 2
    %v1000 = vrot.slane %v268, 2
    %v1003 = vrot.slane %v429, 1
    %v1004 = vrot.slane %v430, 1
    %v1007 = vrot.slane %v753, 7
    %v1008 = vrot.slane %v754, 7
    %v1011 = vsel %vm970, %v999, %v1003
    %v1012 = vsel %vm970, %v1000, %v1004
    %v1013 = vsel %vm973, %v1011, %v591
    %v1014 = vsel %vm973, %v1012, %v592
    %v1015 = vsel %vm976, %v1013, %v1007
    %v1016 = vsel %vm976, %v1014, %v1008
    %v1017 = vrot.slane %v267, 3
    %v1018 = vrot.slane %v268, 3
    %v1021 = vrot.slane %v429, 2
    %v1022 = vrot.slane %v430, 2
    %v1025 = vrot.slane %v591, 1
    %v1026 = vrot.slane %v592, 1
    %v1029 = vsel %vm970, %v1017, %v1021
    %v1030 = vsel %vm970, %v1018, %v1022
    %v1031 = vsel %vm973, %v1029, %v1025
    %v1032 = vsel %vm973, %v1030, %v1026
    %v1033 = vsel %vm976, %v1031, %v753
    %v1034 = vsel %vm976, %v1032, %v754
    %s1035 = sld [smem:[#allocation10]]
    %v1036 = vstv %s1035
    %vm1037 = vcmask 126976
    %1038 = vst.msk [vmem:[%s7] sm:$0x1f] %vm1037, %v1036
    %1039 = vst.msk [vmem:[%s7 + $0x20] sm:$0x1f] %vm1037, %v1036
    %s1040 = sld [smem:[#allocation8]]
    %v1041 = vstv %s1040
    %v1042 = vmul.f32 %v1041, %v977
    %v1043 = vmul.f32 %v1041, %v978
    %s1044 = sld [smem:[#allocation8 + $0x10]]
    %v1045 = vstv %s1044
    %v1046 = vmul.f32 %v1045, %v997
    %v1047 = vmul.f32 %v1045, %v998
    %v1048 = vadd.f32 %v1042, %v1046
    %v1049 = vadd.f32 %v1043, %v1047
    %s1050 = sld [smem:[#allocation8 + $0x20]]
    %v1051 = vstv %s1050
    %v1052 = vmul.f32 %v1051, %v1015
    %v1053 = vmul.f32 %v1051, %v1016
    %v1054 = vadd.f32 %v1048, %v1052
    %v1055 = vadd.f32 %v1049, %v1053
    %s1056 = sld [smem:[#allocation8 + $0x30]]
    %v1057 = vstv %s1056
    %v1058 = vmul.f32 %v1057, %v1033
    %v1059 = vmul.f32 %v1057, %v1034
    %v1060 = vadd.f32 %v1054, %v1058
    %v1061 = vadd.f32 %v1055, %v1059
    %v1062 = vld [vmem:[%s7] sm:$0xf]
    %v1063 = vld [vmem:[%s7 + $0x20] sm:$0xf]
    %v1064 = vadd.f32 %v1062, %v1060
    %v1065 = vadd.f32 %v1063, %v1061
    %vm1066 = vcmask 117760
    %1067 = vst.msk [vmem:[%s7] sm:$0xf] %vm1066, %v1064
    %1068 = vst.msk [vmem:[%s7 + $0x20] sm:$0xf] %vm1066, %v1065
    %s1069 = sld [smem:[#allocation8 + $0x1]]
    %v1070 = vstv %s1069
    %v1071 = vmul.f32 %v1070, %v977
    %v1072 = vmul.f32 %v1070, %v978
    %s1073 = sld [smem:[#allocation8 + $0x11]]
    %v1074 = vstv %s1073
    %v1075 = vmul.f32 %v1074, %v997
    %v1076 = vmul.f32 %v1074, %v998
    %v1077 = vadd.f32 %v1071, %v1075
    %v1078 = vadd.f32 %v1072, %v1076
    %s1079 = sld [smem:[#allocation8 + $0x21]]
    %v1080 = vstv %s1079
    %v1081 = vmul.f32 %v1080, %v1015
    %v1082 = vmul.f32 %v1080, %v1016
    %v1083 = vadd.f32 %v1077, %v1081
    %v1084 = vadd.f32 %v1078, %v1082
    %s1085 = sld [smem:[#allocation8 + $0x31]]
    %v1086 = vstv %s1085
    %v1087 = vmul.f32 %v1086, %v1033
    %v1088 = vmul.f32 %v1086, %v1034
    %v1089 = vadd.f32 %v1083, %v1087
    %v1090 = vadd.f32 %v1084, %v1088
    %v1091 = vld [vmem:[%s7] sm:$0xf]
    %v1092 = vld [vmem:[%s7 + $0x20] sm:$0xf]
    %1095 = vrot.lane.b32.xlu0 %v1089, 1
    %v1096 = vpop.permute.xlu0 %1095
    %1097 = vrot.lane.b32.xlu0 %v1090, 1
    %v1098 = vpop.permute.xlu0 %1097
    %v1101 = vadd.f32 %v1091, %v1096
    %v1102 = vadd.f32 %v1092, %v1098
    %vm1103 = vcmask 125960
    %1104 = vst.msk [vmem:[%s7] sm:$0xf] %vm1103, %v1101
    %1105 = vst.msk [vmem:[%s7 + $0x20] sm:$0xf] %vm1103, %v1102
    %s1106 = sld [smem:[#allocation8 + $0x2]]
    %v1107 = vstv %s1106
    %v1108 = vmul.f32 %v1107, %v977
    %v1109 = vmul.f32 %v1107, %v978
    %s1110 = sld [smem:[#allocation8 + $0x12]]
    %v1111 = vstv %s1110
    %v1112 = vmul.f32 %v1111, %v997
    %v1113 = vmul.f32 %v1111, %v998
    %v1114 = vadd.f32 %v1108, %v1112
    %v1115 = vadd.f32 %v1109, %v1113
    %s1116 = sld [smem:[#allocation8 + $0x22]]
    %v1117 = vstv %s1116
    %v1118 = vmul.f32 %v1117, %v1015
    %v1119 = vmul.f32 %v1117, %v1016
    %v1120 = vadd.f32 %v1114, %v1118
    %v1121 = vadd.f32 %v1115, %v1119
    %s1122 = sld [smem:[#allocation8 + $0x32]]
    %v1123 = vstv %s1122
    %v1124 = vmul.f32 %v1123, %v1033
    %v1125 = vmul.f32 %v1123, %v1034
    %v1126 = vadd.f32 %v1120, %v1124
    %v1127 = vadd.f32 %v1121, %v1125
    %v1128 = vld [vmem:[%s7 + $0x1] sm:$0xf]
    %v1129 = vld [vmem:[%s7 + $0x21] sm:$0xf]
    %v1130 = vadd.f32 %v1128, %v1126
    %v1131 = vadd.f32 %v1129, %v1127
    %1132 = vst.msk [vmem:[%s7 + $0x1] sm:$0xf] %vm1066, %v1130
    %1133 = vst.msk [vmem:[%s7 + $0x21] sm:$0xf] %vm1066, %v1131
    %s1134 = sld [smem:[#allocation8 + $0x3]]
    %v1135 = vstv %s1134
    %v1136 = vmul.f32 %v1135, %v977
    %v1137 = vmul.f32 %v1135, %v978
    %s1138 = sld [smem:[#allocation8 + $0x13]]
    %v1139 = vstv %s1138
    %v1140 = vmul.f32 %v1139, %v997
    %v1141 = vmul.f32 %v1139, %v998
    %v1142 = vadd.f32 %v1136, %v1140
    %v1143 = vadd.f32 %v1137, %v1141
    %s1144 = sld [smem:[#allocation8 + $0x23]]
    %v1145 = vstv %s1144
    %v1146 = vmul.f32 %v1145, %v1015
    %v1147 = vmul.f32 %v1145, %v1016
    %v1148 = vadd.f32 %v1142, %v1146
    %v1149 = vadd.f32 %v1143, %v1147
    %s1150 = sld [smem:[#allocation8 + $0x33]]
    %v1151 = vstv %s1150
    %v1152 = vmul.f32 %v1151, %v1033
    %v1153 = vmul.f32 %v1151, %v1034
    %v1154 = vadd.f32 %v1148, %v1152
    %v1155 = vadd.f32 %v1149, %v1153
    %v1156 = vld [vmem:[%s7 + $0x1] sm:$0xf]
    %v1157 = vld [vmem:[%s7 + $0x21] sm:$0xf]
    %1160 = vrot.lane.b32.xlu0 %v1154, 1
    %v1161 = vpop.permute.xlu0 %1160
    %1162 = vrot.lane.b32.xlu0 %v1155, 1
    %v1163 = vpop.permute.xlu0 %1162
    %v1166 = vadd.f32 %v1156, %v1161
    %v1167 = vadd.f32 %v1157, %v1163
    %1168 = vst.msk [vmem:[%s7 + $0x1] sm:$0xf] %vm1103, %v1166
    %1169 = vst.msk [vmem:[%s7 + $0x21] sm:$0xf] %vm1103, %v1167
    %s1170 = sld [smem:[#allocation10 + $0x1]]
    %v1171 = vstv %s1170
    %s1172 = scalar_lea.vmem %s7, 8
    %1173 = vst.msk [vmem:[%s1172] sm:$0x1f] %vm1037, %v1171
    %1174 = vst.msk [vmem:[%s1172 + $0x20] sm:$0x1f] %vm1037, %v1171
    %s1175 = sld [smem:[#allocation8 + $0x4]]
    %v1176 = vstv %s1175
    %v1177 = vmul.f32 %v1176, %v977
    %v1178 = vmul.f32 %v1176, %v978
    %s1179 = sld [smem:[#allocation8 + $0x14]]
    %v1180 = vstv %s1179
    %v1181 = vmul.f32 %v1180, %v997
    %v1182 = vmul.f32 %v1180, %v998
    %v1183 = vadd.f32 %v1177, %v1181
    %v1184 = vadd.f32 %v1178, %v1182
    %s1185 = sld [smem:[#allocation8 + $0x24]]
    %v1186 = vstv %s1185
    %v1187 = vmul.f32 %v1186, %v1015
    %v1188 = vmul.f32 %v1186, %v1016
    %v1189 = vadd.f32 %v1183, %v1187
    %v1190 = vadd.f32 %v1184, %v1188
    %s1191 = sld [smem:[#allocation8 + $0x34]]
    %v1192 = vstv %s1191
    %v1193 = vmul.f32 %v1192, %v1033
    %v1194 = vmul.f32 %v1192, %v1034
    %v1195 = vadd.f32 %v1189, %v1193
    %v1196 = vadd.f32 %v1190, %v1194
    %v1197 = vld [vmem:[%s1172] sm:$0xf]
    %v1198 = vld [vmem:[%s1172 + $0x20] sm:$0xf]
    %v1199 = vadd.f32 %v1197, %v1195
    %v1200 = vadd.f32 %v1198, %v1196
    %1201 = vst.msk [vmem:[%s1172] sm:$0xf] %vm1066, %v1199
    %1202 = vst.msk [vmem:[%s1172 + $0x20] sm:$0xf] %vm1066, %v1200
    %s1203 = sld [smem:[#allocation8 + $0x5]]
    %v1204 = vstv %s1203
    %v1205 = vmul.f32 %v1204, %v977
    %v1206 = vmul.f32 %v1204, %v978
    %s1207 = sld [smem:[#allocation8 + $0x15]]
    %v1208 = vstv %s1207
    %v1209 = vmul.f32 %v1208, %v997
    %v1210 = vmul.f32 %v1208, %v998
    %v1211 = vadd.f32 %v1205, %v1209
    %v1212 = vadd.f32 %v1206, %v1210
    %s1213 = sld [smem:[#allocation8 + $0x25]]
    %v1214 = vstv %s1213
    %v1215 = vmul.f32 %v1214, %v1015
    %v1216 = vmul.f32 %v1214, %v1016
    %v1217 = vadd.f32 %v1211, %v1215
    %v1218 = vadd.f32 %v1212, %v1216
    %s1219 = sld [smem:[#allocation8 + $0x35]]
    %v1220 = vstv %s1219
    %v1221 = vmul.f32 %v1220, %v1033
    %v1222 = vmul.f32 %v1220, %v1034
    %v1223 = vadd.f32 %v1217, %v1221
    %v1224 = vadd.f32 %v1218, %v1222
    %v1225 = vld [vmem:[%s1172] sm:$0xf]
    %v1226 = vld [vmem:[%s1172 + $0x20] sm:$0xf]
    %1229 = vrot.lane.b32.xlu0 %v1223, 1
    %v1230 = vpop.permute.xlu0 %1229
    %1231 = vrot.lane.b32.xlu0 %v1224, 1
    %v1232 = vpop.permute.xlu0 %1231
    %v1235 = vadd.f32 %v1225, %v1230
    %v1236 = vadd.f32 %v1226, %v1232
    %1237 = vst.msk [vmem:[%s1172] sm:$0xf] %vm1103, %v1235
    %1238 = vst.msk [vmem:[%s1172 + $0x20] sm:$0xf] %vm1103, %v1236
    %s1239 = sld [smem:[#allocation8 + $0x6]]
    %v1240 = vstv %s1239
    %v1241 = vmul.f32 %v1240, %v977
    %v1242 = vmul.f32 %v1240, %v978
    %s1243 = sld [smem:[#allocation8 + $0x16]]
    %v1244 = vstv %s1243
    %v1245 = vmul.f32 %v1244, %v997
    %v1246 = vmul.f32 %v1244, %v998
    %v1247 = vadd.f32 %v1241, %v1245
    %v1248 = vadd.f32 %v1242, %v1246
    %s1249 = sld [smem:[#allocation8 + $0x26]]
    %v1250 = vstv %s1249
    %v1251 = vmul.f32 %v1250, %v1015
    %v1252 = vmul.f32 %v1250, %v1016
    %v1253 = vadd.f32 %v1247, %v1251
    %v1254 = vadd.f32 %v1248, %v1252
    %s1255 = sld [smem:[#allocation8 + $0x36]]
    %v1256 = vstv %s1255
    %v1257 = vmul.f32 %v1256, %v1033
    %v1258 = vmul.f32 %v1256, %v1034
    %v1259 = vadd.f32 %v1253, %v1257
    %v1260 = vadd.f32 %v1254, %v1258
    %v1261 = vld [vmem:[%s1172 + $0x1] sm:$0xf]
    %v1262 = vld [vmem:[%s1172 + $0x21] sm:$0xf]
    %v1263 = vadd.f32 %v1261, %v1259
    %v1264 = vadd.f32 %v1262, %v1260
    %1265 = vst.msk [vmem:[%s1172 + $0x1] sm:$0xf] %vm1066, %v1263
    %1266 = vst.msk [vmem:[%s1172 + $0x21] sm:$0xf] %vm1066, %v1264
    %s1267 = sld [smem:[#allocation8 + $0x7]]
    %v1268 = vstv %s1267
    %v1269 = vmul.f32 %v1268, %v977
    %v1270 = vmul.f32 %v1268, %v978
    %s1271 = sld [smem:[#allocation8 + $0x17]]
    %v1272 = vstv %s1271
    %v1273 = vmul.f32 %v1272, %v997
    %v1274 = vmul.f32 %v1272, %v998
    %v1275 = vadd.f32 %v1269, %v1273
    %v1276 = vadd.f32 %v1270, %v1274
    %s1277 = sld [smem:[#allocation8 + $0x27]]
    %v1278 = vstv %s1277
    %v1279 = vmul.f32 %v1278, %v1015
    %v1280 = vmul.f32 %v1278, %v1016
    %v1281 = vadd.f32 %v1275, %v1279
    %v1282 = vadd.f32 %v1276, %v1280
    %s1283 = sld [smem:[#allocation8 + $0x37]]
    %v1284 = vstv %s1283
    %v1285 = vmul.f32 %v1284, %v1033
    %v1286 = vmul.f32 %v1284, %v1034
    %v1287 = vadd.f32 %v1281, %v1285
    %v1288 = vadd.f32 %v1282, %v1286
    %v1289 = vld [vmem:[%s1172 + $0x1] sm:$0xf]
    %v1290 = vld [vmem:[%s1172 + $0x21] sm:$0xf]
    %1293 = vrot.lane.b32.xlu0 %v1287, 1
    %v1294 = vpop.permute.xlu0 %1293
    %1295 = vrot.lane.b32.xlu0 %v1288, 1
    %v1296 = vpop.permute.xlu0 %1295
    %v1299 = vadd.f32 %v1289, %v1294
    %v1300 = vadd.f32 %v1290, %v1296
    %1301 = vst.msk [vmem:[%s1172 + $0x1] sm:$0xf] %vm1103, %v1299
    %1302 = vst.msk [vmem:[%s1172 + $0x21] sm:$0xf] %vm1103, %v1300
    %s1303 = sld [smem:[#allocation10 + $0x2]]
    %v1304 = vstv %s1303
    %s1305 = scalar_lea.vmem %s7, 16
    %1306 = vst.msk [vmem:[%s1305] sm:$0x1f] %vm1037, %v1304
    %1307 = vst.msk [vmem:[%s1305 + $0x20] sm:$0x1f] %vm1037, %v1304
    %s1308 = sld [smem:[#allocation8 + $0x8]]
    %v1309 = vstv %s1308
    %v1310 = vmul.f32 %v1309, %v977
    %v1311 = vmul.f32 %v1309, %v978
    %s1312 = sld [smem:[#allocation8 + $0x18]]
    %v1313 = vstv %s1312
    %v1314 = vmul.f32 %v1313, %v997
    %v1315 = vmul.f32 %v1313, %v998
    %v1316 = vadd.f32 %v1310, %v1314
    %v1317 = vadd.f32 %v1311, %v1315
    %s1318 = sld [smem:[#allocation8 + $0x28]]
    %v1319 = vstv %s1318
    %v1320 = vmul.f32 %v1319, %v1015
    %v1321 = vmul.f32 %v1319, %v1016
    %v1322 = vadd.f32 %v1316, %v1320
    %v1323 = vadd.f32 %v1317, %v1321
    %s1324 = sld [smem:[#allocation8 + $0x38]]
    %v1325 = vstv %s1324
    %v1326 = vmul.f32 %v1325, %v1033
    %v1327 = vmul.f32 %v1325, %v1034
    %v1328 = vadd.f32 %v1322, %v1326
    %v1329 = vadd.f32 %v1323, %v1327
    %v1330 = vld [vmem:[%s1305] sm:$0xf]
    %v1331 = vld [vmem:[%s1305 + $0x20] sm:$0xf]
    %v1332 = vadd.f32 %v1330, %v1328
    %v1333 = vadd.f32 %v1331, %v1329
    %1334 = vst.msk [vmem:[%s1305] sm:$0xf] %vm1066, %v1332
    %1335 = vst.msk [vmem:[%s1305 + $0x20] sm:$0xf] %vm1066, %v1333
    %s1336 = sld [smem:[#allocation8 + $0x9]]
    %v1337 = vstv %s1336
    %v1338 = vmul.f32 %v1337, %v977
    %v1339 = vmul.f32 %v1337, %v978
    %s1340 = sld [smem:[#allocation8 + $0x19]]
    %v1341 = vstv %s1340
    %v1342 = vmul.f32 %v1341, %v997
    %v1343 = vmul.f32 %v1341, %v998
    %v1344 = vadd.f32 %v1338, %v1342
    %v1345 = vadd.f32 %v1339, %v1343
    %s1346 = sld [smem:[#allocation8 + $0x29]]
    %v1347 = vstv %s1346
    %v1348 = vmul.f32 %v1347, %v1015
    %v1349 = vmul.f32 %v1347, %v1016
    %v1350 = vadd.f32 %v1344, %v1348
    %v1351 = vadd.f32 %v1345, %v1349
    %s1352 = sld [smem:[#allocation8 + $0x39]]
    %v1353 = vstv %s1352
    %v1354 = vmul.f32 %v1353, %v1033
    %v1355 = vmul.f32 %v1353, %v1034
    %v1356 = vadd.f32 %v1350, %v1354
    %v1357 = vadd.f32 %v1351, %v1355
    %v1358 = vld [vmem:[%s1305] sm:$0xf]
    %v1359 = vld [vmem:[%s1305 + $0x20] sm:$0xf]
    %1362 = vrot.lane.b32.xlu0 %v1356, 1
    %v1363 = vpop.permute.xlu0 %1362
    %1364 = vrot.lane.b32.xlu0 %v1357, 1
    %v1365 = vpop.permute.xlu0 %1364
    %v1368 = vadd.f32 %v1358, %v1363
    %v1369 = vadd.f32 %v1359, %v1365
    %1370 = vst.msk [vmem:[%s1305] sm:$0xf] %vm1103, %v1368
    %1371 = vst.msk [vmem:[%s1305 + $0x20] sm:$0xf] %vm1103, %v1369
    %s1372 = sld [smem:[#allocation8 + $0xa]]
    %v1373 = vstv %s1372
    %v1374 = vmul.f32 %v1373, %v977
    %v1375 = vmul.f32 %v1373, %v978
    %s1376 = sld [smem:[#allocation8 + $0x1a]]
    %v1377 = vstv %s1376
    %v1378 = vmul.f32 %v1377, %v997
    %v1379 = vmul.f32 %v1377, %v998
    %v1380 = vadd.f32 %v1374, %v1378
    %v1381 = vadd.f32 %v1375, %v1379
    %s1382 = sld [smem:[#allocation8 + $0x2a]]
    %v1383 = vstv %s1382
    %v1384 = vmul.f32 %v1383, %v1015
    %v1385 = vmul.f32 %v1383, %v1016
    %v1386 = vadd.f32 %v1380, %v1384
    %v1387 = vadd.f32 %v1381, %v1385
    %s1388 = sld [smem:[#allocation8 + $0x3a]]
    %v1389 = vstv %s1388
    %v1390 = vmul.f32 %v1389, %v1033
    %v1391 = vmul.f32 %v1389, %v1034
    %v1392 = vadd.f32 %v1386, %v1390
    %v1393 = vadd.f32 %v1387, %v1391
    %v1394 = vld [vmem:[%s1305 + $0x1] sm:$0xf]
    %v1395 = vld [vmem:[%s1305 + $0x21] sm:$0xf]
    %v1396 = vadd.f32 %v1394, %v1392
    %v1397 = vadd.f32 %v1395, %v1393
    %1398 = vst.msk [vmem:[%s1305 + $0x1] sm:$0xf] %vm1066, %v1396
    %1399 = vst.msk [vmem:[%s1305 + $0x21] sm:$0xf] %vm1066, %v1397
    %s1400 = sld [smem:[#allocation8 + $0xb]]
    %v1401 = vstv %s1400
    %v1402 = vmul.f32 %v1401, %v977
    %v1403 = vmul.f32 %v1401, %v978
    %s1404 = sld [smem:[#allocation8 + $0x1b]]
    %v1405 = vstv %s1404
    %v1406 = vmul.f32 %v1405, %v997
    %v1407 = vmul.f32 %v1405, %v998
    %v1408 = vadd.f32 %v1402, %v1406
    %v1409 = vadd.f32 %v1403, %v1407
    %s1410 = sld [smem:[#allocation8 + $0x2b]]
    %v1411 = vstv %s1410
    %v1412 = vmul.f32 %v1411, %v1015
    %v1413 = vmul.f32 %v1411, %v1016
    %v1414 = vadd.f32 %v1408, %v1412
    %v1415 = vadd.f32 %v1409, %v1413
    %s1416 = sld [smem:[#allocation8 + $0x3b]]
    %v1417 = vstv %s1416
    %v1418 = vmul.f32 %v1417, %v1033
    %v1419 = vmul.f32 %v1417, %v1034
    %v1420 = vadd.f32 %v1414, %v1418
    %v1421 = vadd.f32 %v1415, %v1419
    %v1422 = vld [vmem:[%s1305 + $0x1] sm:$0xf]
    %v1423 = vld [vmem:[%s1305 + $0x21] sm:$0xf]
    %1426 = vrot.lane.b32.xlu0 %v1420, 1
    %v1427 = vpop.permute.xlu0 %1426
    %1428 = vrot.lane.b32.xlu0 %v1421, 1
    %v1429 = vpop.permute.xlu0 %1428
    %v1432 = vadd.f32 %v1422, %v1427
    %v1433 = vadd.f32 %v1423, %v1429
    %1434 = vst.msk [vmem:[%s1305 + $0x1] sm:$0xf] %vm1103, %v1432
    %1435 = vst.msk [vmem:[%s1305 + $0x21] sm:$0xf] %vm1103, %v1433
    %s1436 = sld [smem:[#allocation10 + $0x3]]
    %v1437 = vstv %s1436
    %s1438 = scalar_lea.vmem %s7, 24
    %1439 = vst.msk [vmem:[%s1438] sm:$0x1f] %vm1037, %v1437
    %1440 = vst.msk [vmem:[%s1438 + $0x20] sm:$0x1f] %vm1037, %v1437
    %s1441 = sld [smem:[#allocation8 + $0xc]]
    %v1442 = vstv %s1441
    %v1443 = vmul.f32 %v1442, %v977
    %v1444 = vmul.f32 %v1442, %v978
    %s1445 = sld [smem:[#allocation8 + $0x1c]]
    %v1446 = vstv %s1445
    %v1447 = vmul.f32 %v1446, %v997
    %v1448 = vmul.f32 %v1446, %v998
    %v1449 = vadd.f32 %v1443, %v1447
    %v1450 = vadd.f32 %v1444, %v1448
    %s1451 = sld [smem:[#allocation8 + $0x2c]]
    %v1452 = vstv %s1451
    %v1453 = vmul.f32 %v1452, %v1015
    %v1454 = vmul.f32 %v1452, %v1016
    %v1455 = vadd.f32 %v1449, %v1453
    %v1456 = vadd.f32 %v1450, %v1454
    %s1457 = sld [smem:[#allocation8 + $0x3c]]
    %v1458 = vstv %s1457
    %v1459 = vmul.f32 %v1458, %v1033
    %v1460 = vmul.f32 %v1458, %v1034
    %v1461 = vadd.f32 %v1455, %v1459
    %v1462 = vadd.f32 %v1456, %v1460
    %v1463 = vld [vmem:[%s1438] sm:$0xf]
    %v1464 = vld [vmem:[%s1438 + $0x20] sm:$0xf]
    %v1465 = vadd.f32 %v1463, %v1461
    %v1466 = vadd.f32 %v1464, %v1462
    %1467 = vst.msk [vmem:[%s1438] sm:$0xf] %vm1066, %v1465
    %1468 = vst.msk [vmem:[%s1438 + $0x20] sm:$0xf] %vm1066, %v1466
    %s1469 = sld [smem:[#allocation8 + $0xd]]
    %v1470 = vstv %s1469
    %v1471 = vmul.f32 %v1470, %v977
    %v1472 = vmul.f32 %v1470, %v978
    %s1473 = sld [smem:[#allocation8 + $0x1d]]
    %v1474 = vstv %s1473
    %v1475 = vmul.f32 %v1474, %v997
    %v1476 = vmul.f32 %v1474, %v998
    %v1477 = vadd.f32 %v1471, %v1475
    %v1478 = vadd.f32 %v1472, %v1476
    %s1479 = sld [smem:[#allocation8 + $0x2d]]
    %v1480 = vstv %s1479
    %v1481 = vmul.f32 %v1480, %v1015
    %v1482 = vmul.f32 %v1480, %v1016
    %v1483 = vadd.f32 %v1477, %v1481
    %v1484 = vadd.f32 %v1478, %v1482
    %s1485 = sld [smem:[#allocation8 + $0x3d]]
    %v1486 = vstv %s1485
    %v1487 = vmul.f32 %v1486, %v1033
    %v1488 = vmul.f32 %v1486, %v1034
    %v1489 = vadd.f32 %v1483, %v1487
    %v1490 = vadd.f32 %v1484, %v1488
    %v1491 = vld [vmem:[%s1438] sm:$0xf]
    %v1492 = vld [vmem:[%s1438 + $0x20] sm:$0xf]
    %1495 = vrot.lane.b32.xlu0 %v1489, 1
    %v1496 = vpop.permute.xlu0 %1495
    %1497 = vrot.lane.b32.xlu0 %v1490, 1
    %v1498 = vpop.permute.xlu0 %1497
    %v1501 = vadd.f32 %v1491, %v1496
    %v1502 = vadd.f32 %v1492, %v1498
    %1503 = vst.msk [vmem:[%s1438] sm:$0xf] %vm1103, %v1501
    %1504 = vst.msk [vmem:[%s1438 + $0x20] sm:$0xf] %vm1103, %v1502
    %s1505 = sld [smem:[#allocation8 + $0xe]]
    %v1506 = vstv %s1505
    %v1507 = vmul.f32 %v1506, %v977
    %v1508 = vmul.f32 %v1506, %v978
    %s1509 = sld [smem:[#allocation8 + $0x1e]]
    %v1510 = vstv %s1509
    %v1511 = vmul.f32 %v1510, %v997
    %v1512 = vmul.f32 %v1510, %v998
    %v1513 = vadd.f32 %v1507, %v1511
    %v1514 = vadd.f32 %v1508, %v1512
    %s1515 = sld [smem:[#allocation8 + $0x2e]]
    %v1516 = vstv %s1515
    %v1517 = vmul.f32 %v1516, %v1015
    %v1518 = vmul.f32 %v1516, %v1016
    %v1519 = vadd.f32 %v1513, %v1517
    %v1520 = vadd.f32 %v1514, %v1518
    %s1521 = sld [smem:[#allocation8 + $0x3e]]
    %v1522 = vstv %s1521
    %v1523 = vmul.f32 %v1522, %v1033
    %v1524 = vmul.f32 %v1522, %v1034
    %v1525 = vadd.f32 %v1519, %v1523
    %v1526 = vadd.f32 %v1520, %v1524
    %v1527 = vld [vmem:[%s1438 + $0x1] sm:$0xf]
    %v1528 = vld [vmem:[%s1438 + $0x21] sm:$0xf]
    %v1529 = vadd.f32 %v1527, %v1525
    %v1530 = vadd.f32 %v1528, %v1526
    %1531 = vst.msk [vmem:[%s1438 + $0x1] sm:$0xf] %vm1066, %v1529
    %1532 = vst.msk [vmem:[%s1438 + $0x21] sm:$0xf] %vm1066, %v1530
    %s1533 = sld [smem:[#allocation8 + $0xf]]
    %v1534 = vstv %s1533
    %v1535 = vmul.f32 %v1534, %v977
    %v1536 = vmul.f32 %v1534, %v978
    %s1537 = sld [smem:[#allocation8 + $0x1f]]
    %v1538 = vstv %s1537
    %v1539 = vmul.f32 %v1538, %v997
    %v1540 = vmul.f32 %v1538, %v998
    %v1541 = vadd.f32 %v1535, %v1539
    %v1542 = vadd.f32 %v1536, %v1540
    %s1543 = sld [smem:[#allocation8 + $0x2f]]
    %v1544 = vstv %s1543
    %v1545 = vmul.f32 %v1544, %v1015
    %v1546 = vmul.f32 %v1544, %v1016
    %v1547 = vadd.f32 %v1541, %v1545
    %v1548 = vadd.f32 %v1542, %v1546
    %s1549 = sld [smem:[#allocation8 + $0x3f]]
    %v1550 = vstv %s1549
    %v1551 = vmul.f32 %v1550, %v1033
    %v1552 = vmul.f32 %v1550, %v1034
    %v1553 = vadd.f32 %v1547, %v1551
    %v1554 = vadd.f32 %v1548, %v1552
    %v1555 = vld [vmem:[%s1438 + $0x1] sm:$0xf]
    %v1556 = vld [vmem:[%s1438 + $0x21] sm:$0xf]
    %1559 = vrot.lane.b32.xlu0 %v1553, 1
    %v1560 = vpop.permute.xlu0 %1559
    %1561 = vrot.lane.b32.xlu0 %v1554, 1
    %v1562 = vpop.permute.xlu0 %1561
    %v1565 = vadd.f32 %v1555, %v1560
    %v1566 = vadd.f32 %v1556, %v1562
    %1567 = vst.msk [vmem:[%s1438 + $0x1] sm:$0xf] %vm1103, %v1565
    %1568 = vst.msk [vmem:[%s1438 + $0x21] sm:$0xf] %vm1103, %v1566
    // Predicated region
    $region50: #{model_forward.1} parent=1 // pred_check
      _
    $region51: #{model_forward.1} parent=1 // pred_check_branch
      %1570 = sbr.rel (0) target = $region53
    $region52: #{model_forward.1} parent=1 // pred_region
      _
    $region53: #{model_forward.1} parent=1 // pred_fallthru
      _
    // Predicated region
    $region54: #{model_forward.1} parent=1 // pred_check
      _
    $region55: #{model_forward.1} parent=1 // pred_check_branch
      %1572 = sbr.rel (0) target = $region57
    $region56: #{model_forward.1} parent=1 // pred_region
      _
    $region57: #{model_forward.1} parent=1 // pred_fallthru
      _
    // Predicated region
    $region58: #{model_forward.1} parent=1 // pred_check
      _
    $region59: #{model_forward.1} parent=1 // pred_check_branch
      %1574 = sbr.rel (0) target = $region61
    $region60: #{model_forward.1} parent=1 // pred_region
      _
    $region61: #{model_forward.1} parent=1 // pred_fallthru
      _
    // Predicated region
    $region62: #{model_forward.1} parent=1 // pred_check
      _
    $region63: #{model_forward.1} parent=1 // pred_check_branch
      %1576 = sbr.rel (0) target = $region65
    $region64: #{model_forward.1} parent=1 // pred_region
      _
    $region65: #{model_forward.1} parent=1 // pred_fallthru
      _
    %1577 = vsyncpa [#allocation4], 1
    %1578 = vsyncpa [#allocation6], 1
    %1579 = vsyncpa [#allocation9], 1

</llo_original>
